<compile_context>
chip_gen: v6e
topology: v6e:2x2x1
jax: 0.10.0
libtpu: 0.0.40
codegen_flags: <defaults>
</compile_context>

<pallas_src>
import jax
import jax.numpy as jnp
from jax.experimental import pallas as pl
from jax.experimental.pallas import tpu as pltpu


# ------------------------------ kernel ------------------------------------- #

def _elu(x):
    # ELU(alpha=1): x if x > 0 else exp(x) - 1 (exp arg clamped to <= 0 for safety)
    return jnp.where(x > 0, x, jnp.exp(jnp.minimum(x, 0.0)) - 1.0)


def _softplus(x):
    # PyTorch Softplus (beta=1, threshold=20): x if x > 20 else log(1 + exp(x))
    return jnp.where(x > 20.0, x, jnp.log(1.0 + jnp.exp(jnp.minimum(x, 20.0))))


def _ode_func_kernel(t_ref,                    # scalar prefetch (SMEM), shape (1,)
                     y_ref,                    # [bb, D]   D = feature_size + 2
                     w1t_ref, b1_ref,          # [H, D], [H, 1]   (w1 pre-transposed)
                     w2t_ref, b2_ref,          # [H, H], [H, 1]   (w2 pre-transposed)
                     w3_ref, b3_ref,           # [8, H] (row-replicated), [1, 1]
                     out_ref):                 # [bb, D]
    t = t_ref[0]
    y = y_ref[...]                                               # [bb, D]
    _, D = y_ref.shape
    lane_d = jax.lax.broadcasted_iota(jnp.int32, (1, D), 1)

    # inp = [Lambda_t, t*T, x] == y with column 1 scaled by t.  Fold that scaling
    # into column 1 of W1^T (tiny [H, D] op) instead of touching the [bb, D] tile.
    w1t = w1t_ref[...] * jnp.where(lane_d == 1, t, jnp.float32(1.0))

    # Layer 1: contract over D (A @ B^T form), batch on the lane axis.
    h = jax.lax.dot_general(w1t, y, (((1,), (1,)), ((), ())),
                            preferred_element_type=jnp.float32)  # [H, bb]
    h = _elu(h + b1_ref[...])
    # Layer 2.
    h = jnp.dot(w2t_ref[...], h, preferred_element_type=jnp.float32)   # [H, bb]
    h = _elu(h + b2_ref[...])

    # Final Linear(H, 1) + Softplus, still lane-dense (w3 is row-replicated to 8
    # sublanes so the later transpose is a nicely aligned (8, bb) -> (bb, 8)).
    z8 = jnp.dot(w3_ref[...], h, preferred_element_type=jnp.float32) + b3_ref[0, 0]
    sp8 = _softplus(z8)                                          # [8, bb]

    # Lanes -> sublanes relayout of the per-row scalar, then keep one column.
    sp_col = jnp.transpose(sp8)[:, 0:1]                          # [bb, 1]

    out_val = sp_col * y[:, 1:2]                 # net(inp) * T            [bb, 1]
    # output = concat([out_val, zeros_like(y[:, 1:])], dim=1) via lane select.
    out_ref[...] = jnp.where(lane_d == 0, out_val, jnp.float32(0.0))


# ------------------------------ wrapper ------------------------------------ #

def _round_up(x, m):
    return ((x + m - 1) // m) * m


def context_rec_mlp_ode_func(t, y, params, *, block_b=None):
    """Pallas implementation of ContextRecMLPODEFunc.forward.

    Args:
      t:      scalar (or shape-(1,)) time value.
      y:      [B, 2+H] (batch_time_mode=True) or [2+H] (batch_time_mode=False).
      params: (w1 [D,H], b1 [H], w2 [H,H], b2 [H], w3 [H,1], b3 [1]).
    Returns:
      [B, 2+H] (or [2+H] if y was 1-D): column 0 = net(inp) * T, rest zeros.
    """
    w1, b1, w2, b2, w3, b3 = params
    squeeze = (y.ndim == 1)
    if squeeze:
        y = y[None, :]
    t = jnp.asarray(t, jnp.float32).reshape((1,))

    y = y.astype(jnp.float32)
    B, D = y.shape
    H = w1.shape[1]
    assert w1.shape == (D, H), (w1.shape, D, H)

    w1t = jnp.asarray(w1, jnp.float32).T                    # [H, D]
    w2t = jnp.asarray(w2, jnp.float32).T                    # [H, H]
    b1c = jnp.asarray(b1, jnp.float32).reshape(H, 1)        # [H, 1]
    b2c = jnp.asarray(b2, jnp.float32).reshape(H, 1)        # [H, 1]
    w3_8 = jnp.tile(jnp.asarray(w3, jnp.float32).reshape(1, H), (8, 1))   # [8, H]
    b3c = jnp.asarray(b3, jnp.float32).reshape(1, 1)        # [1, 1]

    # Fixed large batch tiles; grid = cdiv(B, block_b) with Pallas edge masking.
    LANE = 128
    TARGET = 4096            # ~1.1 MB HBM traffic / step; VMEM-safe on v5e/v6e/v7x
    if block_b is None:
        if B > LANE:
            # Guarantee >=2 grid steps so both v7x TensorCores get work.
            block_b = min(TARGET, _round_up(pl.cdiv(B, 2), LANE))
        else:
            block_b = LANE
    block_b = max(LANE, _round_up(int(block_b), LANE))
    grid = (pl.cdiv(B, block_b),)

    # index_maps receive the scalar-prefetch ref as a trailing positional arg.
    batch_spec = pl.BlockSpec((block_b, D), lambda i, t_s: (i, 0))

    def resident(shape):
        return pl.BlockSpec(shape, lambda i, t_s: (0, 0))

    out = pl.pallas_call(
        _ode_func_kernel,
        out_shape=jax.ShapeDtypeStruct((B, D), jnp.float32),
        grid_spec=pltpu.PrefetchScalarGridSpec(
            num_scalar_prefetch=1,                 # t lives in SMEM
            grid=grid,
            in_specs=[
                batch_spec,                        # y
                resident((H, D)),                  # w1^T
                resident((H, 1)),                  # b1
                resident((H, H)),                  # w2^T
                resident((H, 1)),                  # b2
                resident((8, H)),                  # w3 (row-replicated)
                resident((1, 1)),                  # b3
            ],
            out_specs=batch_spec,
        ),
        compiler_params=pltpu.CompilerParams(
            dimension_semantics=("parallel",),     # megacore-shardable batch axis
            vmem_limit_bytes=32 * 1024 * 1024,     # safe on v5e/v6e/v7x
        ),
    )(t, y, w1t, b1c, w2t, b2c, w3_8, b3c)

    return out[0] if squeeze else out


# ------------------------------ reference ---------------------------------- #

def context_rec_mlp_ode_func_ref(t, y, params):
    w1, b1, w2, b2, w3, b3 = params
    squeeze = (y.ndim == 1)
    if squeeze:
        y = y[None, :]
    t = jnp.asarray(t, jnp.float32).reshape(())
    Lambda_t = y[:, 0:1]
    T = y[:, 1:2]
    x = y[:, 2:]
    inp = jnp.concatenate([Lambda_t, t * T, x], axis=1)
    hp = jax.lax.Precision.HIGHEST
    h = jax.nn.elu(jnp.dot(inp, w1, precision=hp) + b1.reshape(1, -1))
    h = jax.nn.elu(jnp.dot(h, w2, precision=hp) + b2.reshape(1, -1))
    z = jnp.dot(h, w3.reshape(-1, 1), precision=hp) + b3.reshape(1, 1)
    out = jax.nn.softplus(z) * T
    out = jnp.concatenate([out, jnp.zeros_like(y[:, 1:])], axis=1)
    return out[0] if squeeze else out


# -------------------------------- main -------------------------------------- #

if __name__ == "__main__":
    key = jax.random.PRNGKey(0)
    H = 32                      # config.hidden_size == feature_size
    B = 300                     # batch (batch_time_mode=True); exercises a 2-step grid + ragged tail
    D = H + 2

    ks = jax.random.split(key, 6)
    Lambda_t = jax.random.uniform(ks[0], (B, 1), jnp.float32, 0.0, 3.0)
    T = jax.random.uniform(ks[1], (B, 1), jnp.float32, 0.1, 5.0)
    x = jax.random.normal(ks[2], (B, H), jnp.float32)
    y = jnp.concatenate([Lambda_t, T, x], axis=1)        # [B, 2+H]
    t = jnp.array([0.6], jnp.float32)

    def init_linear(k, fan_in, fan_out):
        kw, kb = jax.random.split(k)
        bound = 1.0 / (fan_in ** 0.5)
        w = jax.random.uniform(kw, (fan_in, fan_out), jnp.float32, -bound, bound)
        b = jax.random.uniform(kb, (fan_out,), jnp.float32, -bound, bound)
        return w, b

    w1, b1 = init_linear(ks[3], D, H)
    w2, b2 = init_linear(ks[4], H, H)
    w3, b3 = init_linear(ks[5], H, 1)
    params = (w1, b1, w2, b2, w3, b3)

    out = context_rec_mlp_ode_func(t, y, params)
    out = jax.block_until_ready(out)
    ref = context_rec_mlp_ode_func_ref(t, y, params)

    assert out.shape == (B, D)
    if jnp.allclose(out, ref, rtol=1e-4, atol=1e-4):
        print("KERNEL_OK")
    else:
        print("MISMATCH max_abs_err =", float(jnp.max(jnp.abs(out - ref))))
</pallas_src>

<mosaic_0001>
module attributes {stable_mosaic.version = 11 : i64} {
  func.func @_ode_func_kernel(%arg0: i32, %arg1: memref<1xf32, #tpu.memory_space<smem>>, %arg2: memref<256x34xf32, #tpu.memory_space<vmem>>, %arg3: memref<32x34xf32, #tpu.memory_space<vmem>>, %arg4: memref<32x1xf32, #tpu.memory_space<vmem>>, %arg5: memref<32x32xf32, #tpu.memory_space<vmem>>, %arg6: memref<32x1xf32, #tpu.memory_space<vmem>>, %arg7: memref<8x32xf32, #tpu.memory_space<vmem>>, %arg8: memref<1x1xf32, #tpu.memory_space<vmem>>, %arg9: memref<256x34xf32, #tpu.memory_space<vmem>>) attributes {dimension_semantics = [#tpu.dimension_semantics<parallel>], iteration_bounds = array<i64: 2>, scalar_prefetch = 1 : i64, scratch_operands = 0 : i64, tpu.core_type = #tpu.core_type<tc>, window_params = [{transform_indices = @transform_0, window_bounds = array<i64: 256, 34>}, {pipeline_mode = #tpu.pipeline_mode<synchronous>, transform_indices = @transform_1, window_bounds = array<i64: 32, 34>}, {pipeline_mode = #tpu.pipeline_mode<synchronous>, transform_indices = @transform_2, window_bounds = array<i64: 32, 1>}, {pipeline_mode = #tpu.pipeline_mode<synchronous>, transform_indices = @transform_3, window_bounds = array<i64: 32, 32>}, {pipeline_mode = #tpu.pipeline_mode<synchronous>, transform_indices = @transform_4, window_bounds = array<i64: 32, 1>}, {pipeline_mode = #tpu.pipeline_mode<synchronous>, transform_indices = @transform_5, window_bounds = array<i64: 8, 32>}, {pipeline_mode = #tpu.pipeline_mode<synchronous>, transform_indices = @transform_6, window_bounds = array<i64: 1, 1>}, {transform_indices = @transform_7, window_bounds = array<i64: 256, 34>}]} {
    %c0 = arith.constant 0 : index
    %0 = memref.load %arg1[%c0] : memref<1xf32, #tpu.memory_space<smem>>
    %c0_0 = arith.constant 0 : index
    %c0_1 = arith.constant 0 : index
    %1 = vector.load %arg2[%c0_0, %c0_1] : memref<256x34xf32, #tpu.memory_space<vmem>>, vector<256x34xf32>
    %2 = tpu.iota {dimensions = array<i32: 1>} : vector<1x34xi32>
    %c0_2 = arith.constant 0 : index
    %c0_3 = arith.constant 0 : index
    %3 = vector.load %arg3[%c0_2, %c0_3] : memref<32x34xf32, #tpu.memory_space<vmem>>, vector<32x34xf32>
    %c1_i32 = arith.constant 1 : i32
    %4 = vector.broadcast %c1_i32 : i32 to vector<1x34xi32>
    %5 = arith.cmpi eq, %2, %4 : vector<1x34xi32>
    %cst = arith.constant 1.000000e+00 : f32
    %6 = vector.broadcast %0 : f32 to vector<1x34xf32>
    %7 = vector.broadcast %cst : f32 to vector<1x34xf32>
    %8 = arith.select %5, %6, %7 : vector<1x34xi1>, vector<1x34xf32>
    %9 = vector.broadcast %8 : vector<1x34xf32> to vector<32x34xf32>
    %10 = arith.mulf %3, %9 : vector<32x34xf32>
    %cst_4 = arith.constant dense<0.000000e+00> : vector<32x256xf32>
    %11 = tpu.matmul %10, %1, %cst_4 {dimension_numbers = #tpu.dot_dimension_numbers<[1], [1], [0], [0], [0, 0, 1, 0], [], []>} : vector<32x34xf32>, vector<256x34xf32>, vector<32x256xf32> -> vector<32x256xf32>
    %c0_5 = arith.constant 0 : index
    %c0_6 = arith.constant 0 : index
    %12 = vector.load %arg4[%c0_5, %c0_6] : memref<32x1xf32, #tpu.memory_space<vmem>>, vector<32x1xf32>
    %13 = vector.broadcast %12 : vector<32x1xf32> to vector<32x256xf32>
    %14 = arith.addf %11, %13 : vector<32x256xf32>
    %cst_7 = arith.constant 0.000000e+00 : f32
    %15 = vector.broadcast %cst_7 : f32 to vector<32x256xf32>
    %16 = arith.cmpf ogt, %14, %15 : vector<32x256xf32>
    %cst_8 = arith.constant 0.000000e+00 : f32
    %17 = vector.broadcast %cst_8 : f32 to vector<32x256xf32>
    %18 = arith.minimumf %14, %17 : vector<32x256xf32>
    %19 = math.exp %18 : vector<32x256xf32>
    %cst_9 = arith.constant 1.000000e+00 : f32
    %20 = vector.broadcast %cst_9 : f32 to vector<32x256xf32>
    %21 = arith.subf %19, %20 : vector<32x256xf32>
    %22 = arith.select %16, %14, %21 : vector<32x256xi1>, vector<32x256xf32>
    %c0_10 = arith.constant 0 : index
    %c0_11 = arith.constant 0 : index
    %23 = vector.load %arg5[%c0_10, %c0_11] : memref<32x32xf32, #tpu.memory_space<vmem>>, vector<32x32xf32>
    %cst_12 = arith.constant dense<0.000000e+00> : vector<32x256xf32>
    %24 = tpu.matmul %23, %22, %cst_12 {dimension_numbers = #tpu.dot_dimension_numbers<[1], [0], [0], [1], [0, 0, 1, 1], [], []>} : vector<32x32xf32>, vector<32x256xf32>, vector<32x256xf32> -> vector<32x256xf32>
    %c0_13 = arith.constant 0 : index
    %c0_14 = arith.constant 0 : index
    %25 = vector.load %arg6[%c0_13, %c0_14] : memref<32x1xf32, #tpu.memory_space<vmem>>, vector<32x1xf32>
    %26 = vector.broadcast %25 : vector<32x1xf32> to vector<32x256xf32>
    %27 = arith.addf %24, %26 : vector<32x256xf32>
    %cst_15 = arith.constant 0.000000e+00 : f32
    %28 = vector.broadcast %cst_15 : f32 to vector<32x256xf32>
    %29 = arith.cmpf ogt, %27, %28 : vector<32x256xf32>
    %cst_16 = arith.constant 0.000000e+00 : f32
    %30 = vector.broadcast %cst_16 : f32 to vector<32x256xf32>
    %31 = arith.minimumf %27, %30 : vector<32x256xf32>
    %32 = math.exp %31 : vector<32x256xf32>
    %cst_17 = arith.constant 1.000000e+00 : f32
    %33 = vector.broadcast %cst_17 : f32 to vector<32x256xf32>
    %34 = arith.subf %32, %33 : vector<32x256xf32>
    %35 = arith.select %29, %27, %34 : vector<32x256xi1>, vector<32x256xf32>
    %c0_18 = arith.constant 0 : index
    %c0_19 = arith.constant 0 : index
    %36 = vector.load %arg7[%c0_18, %c0_19] : memref<8x32xf32, #tpu.memory_space<vmem>>, vector<8x32xf32>
    %cst_20 = arith.constant dense<0.000000e+00> : vector<8x256xf32>
    %37 = tpu.matmul %36, %35, %cst_20 {dimension_numbers = #tpu.dot_dimension_numbers<[1], [0], [0], [1], [0, 0, 1, 1], [], []>} : vector<8x32xf32>, vector<32x256xf32>, vector<8x256xf32> -> vector<8x256xf32>
    %c0_21 = arith.constant 0 : index
    %c0_22 = arith.constant 0 : index
    %38 = vector.load %arg8[%c0_21, %c0_22] : memref<1x1xf32, #tpu.memory_space<vmem>>, vector<1x1xf32>
    %39 = vector.extract %38[0, 0] : f32 from vector<1x1xf32>
    %40 = vector.broadcast %39 : f32 to vector<8x256xf32>
    %41 = arith.addf %37, %40 : vector<8x256xf32>
    %cst_23 = arith.constant 2.000000e+01 : f32
    %42 = vector.broadcast %cst_23 : f32 to vector<8x256xf32>
    %43 = arith.cmpf ogt, %41, %42 : vector<8x256xf32>
    %cst_24 = arith.constant 2.000000e+01 : f32
    %44 = vector.broadcast %cst_24 : f32 to vector<8x256xf32>
    %45 = arith.minimumf %41, %44 : vector<8x256xf32>
    %46 = math.exp %45 : vector<8x256xf32>
    %cst_25 = arith.constant 1.000000e+00 : f32
    %47 = vector.broadcast %cst_25 : f32 to vector<8x256xf32>
    %48 = arith.addf %47, %46 : vector<8x256xf32>
    %49 = math.log %48 : vector<8x256xf32>
    %50 = arith.select %43, %41, %49 : vector<8x256xi1>, vector<8x256xf32>
    %51 = tpu.transpose %50, [1, 0] : vector<8x256xf32> -> vector<256x8xf32>
    %52 = vector.extract_strided_slice %51 {offsets = [0, 0], sizes = [256, 1], strides = [1, 1]} : vector<256x8xf32> to vector<256x1xf32>
    %53 = vector.extract_strided_slice %1 {offsets = [0, 1], sizes = [256, 1], strides = [1, 1]} : vector<256x34xf32> to vector<256x1xf32>
    %54 = arith.mulf %52, %53 : vector<256x1xf32>
    %c0_i32 = arith.constant 0 : i32
    %55 = vector.broadcast %c0_i32 : i32 to vector<1x34xi32>
    %56 = arith.cmpi eq, %2, %55 : vector<1x34xi32>
    %cst_26 = arith.constant 0.000000e+00 : f32
    %57 = vector.shape_cast %56 : vector<1x34xi1> to vector<1x34xi1>
    %58 = vector.broadcast %57 : vector<1x34xi1> to vector<256x34xi1>
    %59 = vector.shape_cast %54 : vector<256x1xf32> to vector<256x1xf32>
    %60 = vector.broadcast %59 : vector<256x1xf32> to vector<256x34xf32>
    %61 = vector.broadcast %cst_26 : f32 to vector<256x34xf32>
    %62 = arith.select %58, %60, %61 : vector<256x34xi1>, vector<256x34xf32>
    %c0_27 = arith.constant 0 : index
    %c0_28 = arith.constant 0 : index
    %63 = vector.load %arg9[%c0_27, %c0_28] : memref<256x34xf32, #tpu.memory_space<vmem>>, vector<256x34xf32>
    tpu.vector_store %arg9[%c0_27, %c0_28], %62 {strides = array<i32>} : memref<256x34xf32, #tpu.memory_space<vmem>>, vector<256x34xf32>,
    return
  }
  func.func @transform_0(%arg0: i32, %arg1: memref<1xf32, #tpu.memory_space<smem>>) -> (i32, i32) {
    %c0_i32 = arith.constant 0 : i32
    %c0_i32_0 = arith.constant 0 : i32
    return %arg0, %c0_i32 : i32, i32
  }
  func.func @transform_1(%arg0: i32, %arg1: memref<1xf32, #tpu.memory_space<smem>>) -> (i32, i32) {
    %c0_i32 = arith.constant 0 : i32
    %c0_i32_0 = arith.constant 0 : i32
    %c0_i32_1 = arith.constant 0 : i32
    return %c0_i32, %c0_i32_0 : i32, i32
  }
  func.func @transform_2(%arg0: i32, %arg1: memref<1xf32, #tpu.memory_space<smem>>) -> (i32, i32) {
    %c0_i32 = arith.constant 0 : i32
    %c0_i32_0 = arith.constant 0 : i32
    %c0_i32_1 = arith.constant 0 : i32
    return %c0_i32, %c0_i32_0 : i32, i32
  }
  func.func @transform_3(%arg0: i32, %arg1: memref<1xf32, #tpu.memory_space<smem>>) -> (i32, i32) {
    %c0_i32 = arith.constant 0 : i32
    %c0_i32_0 = arith.constant 0 : i32
    %c0_i32_1 = arith.constant 0 : i32
    return %c0_i32, %c0_i32_0 : i32, i32
  }
  func.func @transform_4(%arg0: i32, %arg1: memref<1xf32, #tpu.memory_space<smem>>) -> (i32, i32) {
    %c0_i32 = arith.constant 0 : i32
    %c0_i32_0 = arith.constant 0 : i32
    %c0_i32_1 = arith.constant 0 : i32
    return %c0_i32, %c0_i32_0 : i32, i32
  }
  func.func @transform_5(%arg0: i32, %arg1: memref<1xf32, #tpu.memory_space<smem>>) -> (i32, i32) {
    %c0_i32 = arith.constant 0 : i32
    %c0_i32_0 = arith.constant 0 : i32
    %c0_i32_1 = arith.constant 0 : i32
    return %c0_i32, %c0_i32_0 : i32, i32
  }
  func.func @transform_6(%arg0: i32, %arg1: memref<1xf32, #tpu.memory_space<smem>>) -> (i32, i32) {
    %c0_i32 = arith.constant 0 : i32
    %c0_i32_0 = arith.constant 0 : i32
    %c0_i32_1 = arith.constant 0 : i32
    return %c0_i32, %c0_i32_0 : i32, i32
  }
  func.func @transform_7(%arg0: i32, %arg1: memref<1xf32, #tpu.memory_space<smem>>) -> (i32, i32) {
    %c0_i32 = arith.constant 0 : i32
    %c0_i32_0 = arith.constant 0 : i32
    return %arg0, %c0_i32 : i32, i32
  }
}

</mosaic_0001>

<llo_original>
// kernel: tpu_custom_call.1
$region0: #{tpu_custom_call.1}
  #allocation0 [shape = 'u32[]', space=smem, size = 0x4, offset = 0x4, fixed_abs, tag = 'smem constant byte address 0x4 - core index']
  #allocation1 [shape = 'u32[144,128]{1,0:T(1,128)}', space=vmem, size = 0x12000, scoped, tag = 'internal scratch']
  #allocation2 [shape = 's32[1]{0}', space=sflag, size = 0x4, scoped, tag = 'scoped memory for tpu_custom_call.1']
  #allocation3 [shape = 'f32[1]{0:T(128)S(6)}', space=smem, size = 0x200, scoped, tag = 'prefetched SMEM operand 0']
  #allocation4 [shape = 'f32[1,1]{1,0:T(1,128)S(1)}', space=vmem, size = 0x200, scoped, tag = 'scoped memory for tpu_custom_call.1']
  %s0 = inlined_call_operand.<no memory space> [shape: f32[1], index: 0, kind: input, shape index: {}]
  %s1 = inlined_call_operand.vmem [shape: f32[300,34], index: 1, kind: input, shape index: {}]
  %s2 = inlined_call_operand.vmem [shape: f32[32,34], index: 2, kind: input, shape index: {}]
  %s3 = inlined_call_operand.vmem [shape: f32[32,1], index: 3, kind: input, shape index: {}]
  %s4 = inlined_call_operand.vmem [shape: f32[32,32], index: 4, kind: input, shape index: {}]
  %s5 = inlined_call_operand.vmem [shape: f32[32,1], index: 5, kind: input, shape index: {}]
  %s6 = inlined_call_operand.vmem [shape: f32[8,32], index: 6, kind: input, shape index: {}]
  %s7 = inlined_call_operand.<no memory space> [shape: f32[1,1], index: 7, kind: input, shape index: {}]
  %s8 = inlined_call_operand.vmem [shape: f32[300,34], index: 8, kind: output, shape index: {}]
  %s9 = sld [smem:[#allocation0]]
  $region109: #{tpu_custom_call.1} parent=0
    _
  %s11 = ssub.s32 1, %s9
  %s12 = scalar_select 0, %s11, %s9
  %13 = sst [smem:[#allocation3]] %s0
  %v14 = vstv %s7
  %15 = vst [vmem:[#allocation4] sm:$0x1] %v14
  $region1: #{tpu_custom_call.1} parent=0
    #allocation5 [shape = 'u8[262144]{0}', space=vmem, size = 0x40000, scoped, tag = 'output window, operand 0']
    loop: start=0, step=1, limit=4
    $region2: #{tpu_custom_call.1} parent=1 // loop_pre_header
      _
    $region3: #{tpu_custom_call.1} parent=1 // loop_header
      %s17 = sphi 0, %s21
      %p18 = scmp.ge.s32.totalorder %s17, 4
      %s27 = sphi 0, %s29
      %s30 = sphi 0, %s27
      %s31 = sphi 0, %s30
      %s47 = sphi 0, %s31
      %s51 = sphi 0, %s51
      %s53 = sphi 0, %s51
      %s54 = sphi 0, %s53
      %s68 = sphi 0, %s54
      %s72 = sphi 0, %s72
      %s74 = sphi 0, %s72
      %s75 = sphi 0, %s74
      %s89 = sphi 0, %s75
      %s93 = sphi 0, %s93
      %s95 = sphi 0, %s93
      %s96 = sphi 0, %s95
      %s110 = sphi 0, %s96
      %s114 = sphi 0, %s114
      %s116 = sphi 0, %s114
      %s117 = sphi 0, %s116
      %s131 = sphi 0, %s117
      %s135 = sphi 0, %s135
      %s137 = sphi 0, %s135
      %s138 = sphi 0, %s137
      %s152 = sphi 0, %s138
      %s156 = sphi 0, %s156
      %s158 = sphi 0, %s156
      %s159 = sphi 0, %s158
      %s173 = sphi 0, %s159
      %s179 = sphi 0, %s181
      %s182 = sphi 0, %s179
      %s183 = sphi 0, %s182
      %s199 = sphi 0, %s183
    $region4: #{tpu_custom_call.1} parent=1 // loop_header_branch
      %20 = sbr.rel (%p18) target = $region8
    $region5: #{tpu_custom_call.1} parent=1 // loop_body
      %s22 = ssub.s32 %s17, 1
      %s23 = ssub.s32 %s17, 2
      %s24 = sadd.s32 %s17, 1
      %s25 = ssub.s32 %s17, %s24
      %p26 = scmp.eq.s32.totalorder %s25, 0
      %s28 = sadd.s32 %s27, 1
      %s29 = scalar_select %p26, %s27, %s28
      %p32 = pneg %p26
      %p33 = scmp.eq.s32.totalorder %s17, 1
      %p34 = por %p32, %p33
      %p35 = scmp.ne.s32.totalorder %s27, %s30
      %p36 = scmp.eq.s32.totalorder %s17, 0
      %p37 = por %p35, %p36
      %p38 = scmp.ne.s32.totalorder %s27, %s30
      %p39 = scmp.eq.s32.totalorder %s22, 1
      %p40 = por %p38, %p39
      %p41 = scmp.ne.s32.totalorder %s30, %s31
      %p42 = scmp.eq.s32.totalorder %s22, 0
      %p43 = por %p41, %p42
      %p44 = scmp.ne.s32.totalorder %s30, %s31
      %p45 = scmp.eq.s32.totalorder %s23, 1
      %p46 = por %p44, %p45
      %p48 = scmp.ne.s32.totalorder %s31, %s47
      %p49 = scmp.eq.s32.totalorder %s23, 0
      %p50 = por %p48, %p49
      %s52 = sadd.s32 %s51, 1
      %p55 = scmp.eq.s32.totalorder %s17, 1
      %p56 = scmp.ne.s32.totalorder %s51, %s53
      %p57 = scmp.eq.s32.totalorder %s17, 0
      %p58 = por %p56, %p57
      %p59 = scmp.ne.s32.totalorder %s51, %s53
      %p60 = scmp.eq.s32.totalorder %s22, 1
      %p61 = por %p59, %p60
      %p62 = scmp.ne.s32.totalorder %s53, %s54
      %p63 = scmp.eq.s32.totalorder %s22, 0
      %p64 = por %p62, %p63
      %p65 = scmp.ne.s32.totalorder %s53, %s54
      %p66 = scmp.eq.s32.totalorder %s23, 1
      %p67 = por %p65, %p66
      %p69 = scmp.ne.s32.totalorder %s54, %s68
      %p70 = scmp.eq.s32.totalorder %s23, 0
      %p71 = por %p69, %p70
      %s73 = sadd.s32 %s72, 1
      %p76 = scmp.eq.s32.totalorder %s17, 1
      %p77 = scmp.ne.s32.totalorder %s72, %s74
      %p78 = scmp.eq.s32.totalorder %s17, 0
      %p79 = por %p77, %p78
      %p80 = scmp.ne.s32.totalorder %s72, %s74
      %p81 = scmp.eq.s32.totalorder %s22, 1
      %p82 = por %p80, %p81
      %p83 = scmp.ne.s32.totalorder %s74, %s75
      %p84 = scmp.eq.s32.totalorder %s22, 0
      %p85 = por %p83, %p84
      %p86 = scmp.ne.s32.totalorder %s74, %s75
      %p87 = scmp.eq.s32.totalorder %s23, 1
      %p88 = por %p86, %p87
      %p90 = scmp.ne.s32.totalorder %s75, %s89
      %p91 = scmp.eq.s32.totalorder %s23, 0
      %p92 = por %p90, %p91
      %s94 = sadd.s32 %s93, 1
      %p97 = scmp.eq.s32.totalorder %s17, 1
      %p98 = scmp.ne.s32.totalorder %s93, %s95
      %p99 = scmp.eq.s32.totalorder %s17, 0
      %p100 = por %p98, %p99
      %p101 = scmp.ne.s32.totalorder %s93, %s95
      %p102 = scmp.eq.s32.totalorder %s22, 1
      %p103 = por %p101, %p102
      %p104 = scmp.ne.s32.totalorder %s95, %s96
      %p105 = scmp.eq.s32.totalorder %s22, 0
      %p106 = por %p104, %p105
      %p107 = scmp.ne.s32.totalorder %s95, %s96
      %p108 = scmp.eq.s32.totalorder %s23, 1
      %p109 = por %p107, %p108
      %p111 = scmp.ne.s32.totalorder %s96, %s110
      %p112 = scmp.eq.s32.totalorder %s23, 0
      %p113 = por %p111, %p112
      %s115 = sadd.s32 %s114, 1
      %p118 = scmp.eq.s32.totalorder %s17, 1
      %p119 = scmp.ne.s32.totalorder %s114, %s116
      %p120 = scmp.eq.s32.totalorder %s17, 0
      %p121 = por %p119, %p120
      %p122 = scmp.ne.s32.totalorder %s114, %s116
      %p123 = scmp.eq.s32.totalorder %s22, 1
      %p124 = por %p122, %p123
      %p125 = scmp.ne.s32.totalorder %s116, %s117
      %p126 = scmp.eq.s32.totalorder %s22, 0
      %p127 = por %p125, %p126
      %p128 = scmp.ne.s32.totalorder %s116, %s117
      %p129 = scmp.eq.s32.totalorder %s23, 1
      %p130 = por %p128, %p129
      %p132 = scmp.ne.s32.totalorder %s117, %s131
      %p133 = scmp.eq.s32.totalorder %s23, 0
      %p134 = por %p132, %p133
      %s136 = sadd.s32 %s135, 1
      %p139 = scmp.eq.s32.totalorder %s17, 1
      %p140 = scmp.ne.s32.totalorder %s135, %s137
      %p141 = scmp.eq.s32.totalorder %s17, 0
      %p142 = por %p140, %p141
      %p143 = scmp.ne.s32.totalorder %s135, %s137
      %p144 = scmp.eq.s32.totalorder %s22, 1
      %p145 = por %p143, %p144
      %p146 = scmp.ne.s32.totalorder %s137, %s138
      %p147 = scmp.eq.s32.totalorder %s22, 0
      %p148 = por %p146, %p147
      %p149 = scmp.ne.s32.totalorder %s137, %s138
      %p150 = scmp.eq.s32.totalorder %s23, 1
      %p151 = por %p149, %p150
      %p153 = scmp.ne.s32.totalorder %s138, %s152
      %p154 = scmp.eq.s32.totalorder %s23, 0
      %p155 = por %p153, %p154
      %s157 = sadd.s32 %s156, 1
      %p160 = scmp.eq.s32.totalorder %s17, 1
      %p161 = scmp.ne.s32.totalorder %s156, %s158
      %p162 = scmp.eq.s32.totalorder %s17, 0
      %p163 = por %p161, %p162
      %p164 = scmp.ne.s32.totalorder %s156, %s158
      %p165 = scmp.eq.s32.totalorder %s22, 1
      %p166 = por %p164, %p165
      %p167 = scmp.ne.s32.totalorder %s158, %s159
      %p168 = scmp.eq.s32.totalorder %s22, 0
      %p169 = por %p167, %p168
      %p170 = scmp.ne.s32.totalorder %s158, %s159
      %p171 = scmp.eq.s32.totalorder %s23, 1
      %p172 = por %p170, %p171
      %p174 = scmp.ne.s32.totalorder %s159, %s173
      %p175 = scmp.eq.s32.totalorder %s23, 0
      %p176 = por %p174, %p175
      %s177 = ssub.s32 %s17, %s24
      %p178 = scmp.eq.s32.totalorder %s177, 0
      %s180 = sadd.s32 %s179, 1
      %s181 = scalar_select %p178, %s179, %s180
      %p184 = pneg %p178
      %p185 = scmp.eq.s32.totalorder %s17, 1
      %p186 = por %p184, %p185
      %p187 = scmp.ne.s32.totalorder %s179, %s182
      %p188 = scmp.eq.s32.totalorder %s17, 0
      %p189 = por %p187, %p188
      %p190 = scmp.ne.s32.totalorder %s179, %s182
      %p191 = scmp.eq.s32.totalorder %s22, 1
      %p192 = por %p190, %p191
      %p193 = scmp.ne.s32.totalorder %s182, %s183
      %p194 = scmp.eq.s32.totalorder %s22, 0
      %p195 = por %p193, %p194
      %p196 = scmp.ne.s32.totalorder %s182, %s183
      %p197 = scmp.eq.s32.totalorder %s23, 1
      %p198 = por %p196, %p197
      %p200 = scmp.ne.s32.totalorder %s183, %s199
      %p201 = scmp.eq.s32.totalorder %s23, 0
      %p202 = por %p200, %p201
      %p203 = scmp.le.s32.totalorder 1, %s17
      %p204 = scmp.lt.s32.totalorder %s17, 3
      %p205 = pnand %p203, %p204
      %p206 = pneg %p205
      // Predicated region
      $region9: #{tpu_custom_call.1} parent=5 // pred_check
        _
      $region10: #{tpu_custom_call.1} parent=5 // pred_check_branch
        %208 = sbr.rel (%p205) target = $region12
      $region11: #{tpu_custom_call.1} parent=5 // pred_region
        %s209 = ssub.s32 %s17, 1
        // Predicated region
        $region13: #{tpu_custom_call.1} parent=11 // pred_check
          %p210 = pneg %p64
        $region14: #{tpu_custom_call.1} parent=11 // pred_check_branch
          %212 = sbr.rel (%p210) target = $region16
        $region15: #{tpu_custom_call.1} parent=11 // pred_region
          _
        $region16: #{tpu_custom_call.1} parent=11 // pred_fallthru
          _
        // Predicated region
        $region17: #{tpu_custom_call.1} parent=11 // pred_check
          %p213 = pneg %p85
        $region18: #{tpu_custom_call.1} parent=11 // pred_check_branch
          %215 = sbr.rel (%p213) target = $region20
        $region19: #{tpu_custom_call.1} parent=11 // pred_region
          _
        $region20: #{tpu_custom_call.1} parent=11 // pred_fallthru
          _
        // Predicated region
        $region21: #{tpu_custom_call.1} parent=11 // pred_check
          %p216 = pneg %p106
        $region22: #{tpu_custom_call.1} parent=11 // pred_check_branch
          %218 = sbr.rel (%p216) target = $region24
        $region23: #{tpu_custom_call.1} parent=11 // pred_region
          _
        $region24: #{tpu_custom_call.1} parent=11 // pred_fallthru
          _
        // Predicated region
        $region25: #{tpu_custom_call.1} parent=11 // pred_check
          %p219 = pneg %p127
        $region26: #{tpu_custom_call.1} parent=11 // pred_check_branch
          %221 = sbr.rel (%p219) target = $region28
        $region27: #{tpu_custom_call.1} parent=11 // pred_region
          _
        $region28: #{tpu_custom_call.1} parent=11 // pred_fallthru
          _
        // Predicated region
        $region29: #{tpu_custom_call.1} parent=11 // pred_check
          %p222 = pneg %p148
        $region30: #{tpu_custom_call.1} parent=11 // pred_check_branch
          %224 = sbr.rel (%p222) target = $region32
        $region31: #{tpu_custom_call.1} parent=11 // pred_region
          _
        $region32: #{tpu_custom_call.1} parent=11 // pred_fallthru
          _
        // Predicated region
        $region33: #{tpu_custom_call.1} parent=11 // pred_check
          %p225 = pneg %p169
        $region34: #{tpu_custom_call.1} parent=11 // pred_check_branch
          %227 = sbr.rel (%p225) target = $region36
        $region35: #{tpu_custom_call.1} parent=11 // pred_region
          _
        $region36: #{tpu_custom_call.1} parent=11 // pred_fallthru
          _
      $region12: #{tpu_custom_call.1} parent=5 // pred_fallthru
        _
      %p228 = scmp.lt.s32.totalorder %s17, 2
      // Predicated region
      $region37: #{tpu_custom_call.1} parent=5 // pred_check
        %p229 = pneg %p228
      $region38: #{tpu_custom_call.1} parent=5 // pred_check_branch
        %231 = sbr.rel (%p229) target = $region40
      $region39: #{tpu_custom_call.1} parent=5 // pred_region
        // Predicated region
        $region41: #{tpu_custom_call.1} parent=39 // pred_check
          %p232 = pneg %p37
        $region42: #{tpu_custom_call.1} parent=39 // pred_check_branch
          %234 = sbr.rel (%p232) target = $region44
        $region43: #{tpu_custom_call.1} parent=39 // pred_region
          %s235 = smul.u32 32, %s17
          %s236 = ssub.s32 38, %s235
          %p237 = scmp.lt.s32.totalorder %s236, 32
          %s238 = scalar_select %p237, %s236, 32
          %s239 = smul.u32 128, %s238
          %p240 = scmp.lt.s32.totalorder %s235, 37
          %s241 = scalar_select %p240, %s235, 37
          %s242 = smul.addr %s241, 8
          %s243 = scalar_lea.vmem %s1, %s242
          %s244 = smul.u32 32, %s17
          %s245 = ssub.s32 38, %s244
          %p246 = scmp.lt.s32.totalorder %s245, 32
          %s247 = scalar_select %p246, %s245, 32
          %s248 = smul.u32 128, %s247
        $region44: #{tpu_custom_call.1} parent=39 // pred_fallthru
          _
      $region40: #{tpu_custom_call.1} parent=5 // pred_fallthru
        _
      %p249 = scmp.le.s32.totalorder 1, %s17
      %p250 = scmp.lt.s32.totalorder %s17, 3
      %p251 = pnand %p249, %p250
      %p252 = pneg %p251
      // Predicated region
      $region45: #{tpu_custom_call.1} parent=5 // pred_check
        _
      $region46: #{tpu_custom_call.1} parent=5 // pred_check_branch
        %254 = sbr.rel (%p251) target = $region48
      $region47: #{tpu_custom_call.1} parent=5 // pred_region
        %s255 = ssub.s32 %s17, 1
        %s256 = smul.u32 32, %s22
        %s257 = ssub.s32 38, %s256
        %p258 = scmp.lt.s32.totalorder %s257, 32
        %s259 = scalar_select %p258, %s257, 32
        %s260 = smul.u32 128, %s259
        %p261 = scmp.lt.s32.totalorder %s256, 37
        %s262 = scalar_select %p261, %s256, 37
        %s263 = smul.addr %s262, 8
        %s264 = scalar_lea.vmem %s1, %s263
        %p265 = pneg %p43
        %p266 = pneg %p40
        %p267 = pneg %p64
        %p268 = pneg %p61
        %p269 = pneg %p85
        %p270 = pneg %p82
        %p271 = pneg %p106
        %p272 = pneg %p103
        %p273 = pneg %p127
        %p274 = pneg %p124
        %p275 = pneg %p148
        %p276 = pneg %p145
        %p277 = pneg %p169
        %p278 = pneg %p166
        %p279 = pneg %p195
        %p280 = pneg %p192
        %s281 = sand.u32 %s182, 1
        %s282 = sand.u32 %s182, 1
        %s283 = smul.addr %s282, 256
        %s284 = scalar_lea.vmem [#allocation5], %s283
        %s285 = smul.u32 32, %s22
        %s286 = ssub.s32 38, %s285
        %p287 = scmp.lt.s32.totalorder %s286, 32
        %s288 = scalar_select %p287, %s286, 32
        %s289 = smul.u32 128, %s288
        %p290 = scmp.lt.s32.totalorder %s285, 37
        %s291 = scalar_select %p290, %s285, 37
        %s292 = smul.addr %s291, 8
        %s293 = scalar_lea.vmem %s1, %s292
        %s294 = smul.u32 32, %s22
        %s295 = ssub.s32 38, %s294
        %p296 = scmp.lt.s32.totalorder %s295, 32
        %s297 = scalar_select %p296, %s295, 32
        %s298 = smul.u32 128, %s297
        %s299 = smul.u32 32, %s22
        %s300 = ssub.s32 38, %s299
        %p301 = scmp.lt.s32.totalorder %s300, 32
        %s302 = scalar_select %p301, %s300, 32
        %s303 = smul.u32 128, %s302
        %s304 = sld [smem:[#allocation3]]
        %v305 = vld [vmem:[%s293] sm:$0xff]
        %v306 = vld [vmem:[%s293 + $0x8] sm:$0xff]
        %v307 = vld [vmem:[%s293 + $0x10] sm:$0xff]
        %v308 = vld [vmem:[%s293 + $0x18] sm:$0xff]
        %v309 = vld [vmem:[%s293 + $0x20] sm:$0xff]
        %v310 = vld [vmem:[%s293 + $0x28] sm:$0xff]
        %v311 = vld [vmem:[%s293 + $0x30] sm:$0xff]
        %v312 = vld [vmem:[%s293 + $0x38] sm:$0xff]
        %v313 = vld [vmem:[%s293 + $0x40] sm:$0xff]
        %v314 = vld [vmem:[%s293 + $0x48] sm:$0xff]
        %v315 = vld [vmem:[%s293 + $0x50] sm:$0xff]
        %v316 = vld [vmem:[%s293 + $0x58] sm:$0xff]
        %v317 = vld [vmem:[%s293 + $0x60] sm:$0xff]
        %v318 = vld [vmem:[%s293 + $0x68] sm:$0xff]
        %v319 = vld [vmem:[%s293 + $0x70] sm:$0xff]
        %v320 = vld [vmem:[%s293 + $0x78] sm:$0xff]
        %v321 = vld [vmem:[%s293 + $0x80] sm:$0xff]
        %v322 = vld [vmem:[%s293 + $0x88] sm:$0xff]
        %v323 = vld [vmem:[%s293 + $0x90] sm:$0xff]
        %v324 = vld [vmem:[%s293 + $0x98] sm:$0xff]
        %v325 = vld [vmem:[%s293 + $0xa0] sm:$0xff]
        %v326 = vld [vmem:[%s293 + $0xa8] sm:$0xff]
        %v327 = vld [vmem:[%s293 + $0xb0] sm:$0xff]
        %v328 = vld [vmem:[%s293 + $0xb8] sm:$0xff]
        %v329 = vld [vmem:[%s293 + $0xc0] sm:$0xff]
        %v330 = vld [vmem:[%s293 + $0xc8] sm:$0xff]
        %v331 = vld [vmem:[%s293 + $0xd0] sm:$0xff]
        %v332 = vld [vmem:[%s293 + $0xd8] sm:$0xff]
        %v333 = vld [vmem:[%s293 + $0xe0] sm:$0xff]
        %v334 = vld [vmem:[%s293 + $0xe8] sm:$0xff]
        %v335 = vld [vmem:[%s293 + $0xf0] sm:$0xff]
        %v336 = vld [vmem:[%s293 + $0xf8] sm:$0xff]
        %v337 = vlaneseq
        %v338 = vand.u32 %v337, 127
        %v339 = vld [vmem:[%s2] sm:$0xff]
        %v340 = vld [vmem:[%s2 + $0x8] sm:$0xff]
        %v341 = vld [vmem:[%s2 + $0x10] sm:$0xff]
        %v342 = vld [vmem:[%s2 + $0x18] sm:$0xff]
        %vm343 = vcmp.eq.s32.totalorder %v338, 1
        %v344 = vstv %s304
        %v345 = vsel %vm343, %v344, 1.0
        %v346 = vmul.f32 %v339, %v345
        %v347 = vmul.f32 %v340, %v345
        %v348 = vmul.f32 %v341, %v345
        %v349 = vmul.f32 %v342, %v345
        %v350 = vld [vmem:[%s3] sm:$0xff]
        %v351 = vld [vmem:[%s3 + $0x8] sm:$0xff]
        %v352 = vld [vmem:[%s3 + $0x10] sm:$0xff]
        %v353 = vld [vmem:[%s3 + $0x18] sm:$0xff]
        %355 = vset.pattern.permute.xlu0 0
        %356 = vperm.xlu0 %355, %v350
        %v357 = vpop.permute.xlu0 %356
        %360 = vset.pattern.permute.xlu0 0
        %361 = vperm.xlu0 %360, %v351
        %v362 = vpop.permute.xlu0 %361
        %365 = vset.pattern.permute.xlu0 0
        %366 = vperm.xlu0 %365, %v352
        %v367 = vpop.permute.xlu0 %366
        %370 = vset.pattern.permute.xlu0 0
        %371 = vperm.xlu0 %370, %v353
        %v372 = vpop.permute.xlu0 %371
        %vm374 = vcmask 277504
        %v376 = vsel %vm374, %v346, 0
        %v379 = vsel %vm374, %v347, 0
        %v382 = vsel %vm374, %v348, 0
        %v385 = vsel %vm374, %v349, 0
        %v388 = vsel %vm374, %v305, 0
        %v391 = vsel %vm374, %v306, 0
        %v394 = vsel %vm374, %v307, 0
        %v397 = vsel %vm374, %v308, 0
        %v400 = vsel %vm374, %v309, 0
        %v403 = vsel %vm374, %v310, 0
        %v406 = vsel %vm374, %v311, 0
        %v409 = vsel %vm374, %v312, 0
        %v412 = vsel %vm374, %v313, 0
        %v415 = vsel %vm374, %v314, 0
        %v418 = vsel %vm374, %v315, 0
        %v421 = vsel %vm374, %v316, 0
        %v424 = vsel %vm374, %v317, 0
        %v427 = vsel %vm374, %v318, 0
        %v430 = vsel %vm374, %v319, 0
        %v433 = vsel %vm374, %v320, 0
        %v436 = vsel %vm374, %v321, 0
        %v439 = vsel %vm374, %v322, 0
        %v442 = vsel %vm374, %v323, 0
        %v445 = vsel %vm374, %v324, 0
        %v448 = vsel %vm374, %v325, 0
        %v451 = vsel %vm374, %v326, 0
        %v454 = vsel %vm374, %v327, 0
        %v457 = vsel %vm374, %v328, 0
        %v460 = vsel %vm374, %v329, 0
        %v463 = vsel %vm374, %v330, 0
        %v466 = vsel %vm374, %v331, 0
        %v469 = vsel %vm374, %v332, 0
        %v472 = vsel %vm374, %v333, 0
        %v475 = vsel %vm374, %v334, 0
        %v478 = vsel %vm374, %v335, 0
        %v481 = vsel %vm374, %v336, 0
        %483 = vmatprep.subr.mxu0 0.0
        %484 = vmatpush1.xpose.msra.mxu0 %v433
        %485 = vmatprep.subr.mxu0 0.0
        %486 = vmatpush1.xpose.msra.mxu0 %v430
        %487 = vmatprep.subr.mxu0 0.0
        %488 = vmatpush1.xpose.msra.mxu0 %v427
        %489 = vmatprep.subr.mxu0 0.0
        %490 = vmatpush1.xpose.msra.mxu0 %v424
        %491 = vmatprep.subr.mxu0 0.0
        %492 = vmatpush1.xpose.msra.mxu0 %v421
        %493 = vmatprep.subr.mxu0 0.0
        %494 = vmatpush1.xpose.msra.mxu0 %v418
        %495 = vmatprep.subr.mxu0 0.0
        %496 = vmatpush1.xpose.msra.mxu0 %v415
        %497 = vmatprep.subr.mxu0 0.0
        %498 = vmatpush1.xpose.msra.mxu0 %v412
        %499 = vmatprep.subr.mxu0 0.0
        %500 = vmatpush1.xpose.msra.mxu0 %v409
        %501 = vmatprep.subr.mxu0 0.0
        %502 = vmatpush1.xpose.msra.mxu0 %v406
        %503 = vmatprep.subr.mxu0 0.0
        %504 = vmatpush1.xpose.msra.mxu0 %v403
        %505 = vmatprep.subr.mxu0 0.0
        %506 = vmatpush1.xpose.msra.mxu0 %v400
        %507 = vmatprep.subr.mxu0 0.0
        %508 = vmatpush1.xpose.msra.mxu0 %v397
        %509 = vmatprep.subr.mxu0 0.0
        %510 = vmatpush1.xpose.msra.mxu0 %v394
        %511 = vmatprep.subr.mxu0 0.0
        %512 = vmatpush1.xpose.msra.mxu0 %v391
        %513 = vmatprep.subr.mxu0 0.0
        %514 = vmatpush1.xpose.msra.mxu0 %v388
        %515 = vmatprep.subr.mxu0 0.0
        %516 = vmatpush2.xpose.msra.mxu0 %v481
        %517 = vmatprep.subr.mxu0 0.0
        %518 = vmatpush2.xpose.msra.mxu0 %v478
        %519 = vmatprep.subr.mxu0 0.0
        %520 = vmatpush2.xpose.msra.mxu0 %v475
        %521 = vmatprep.subr.mxu0 0.0
        %522 = vmatpush2.xpose.msra.mxu0 %v472
        %523 = vmatprep.subr.mxu0 0.0
        %524 = vmatpush2.xpose.msra.mxu0 %v469
        %525 = vmatprep.subr.mxu0 0.0
        %526 = vmatpush2.xpose.msra.mxu0 %v466
        %527 = vmatprep.subr.mxu0 0.0
        %528 = vmatpush2.xpose.msra.mxu0 %v463
        %529 = vmatprep.subr.mxu0 0.0
        %530 = vmatpush2.xpose.msra.mxu0 %v460
        %531 = vmatprep.subr.mxu0 0.0
        %532 = vmatpush2.xpose.msra.mxu0 %v457
        %533 = vmatprep.subr.mxu0 0.0
        %534 = vmatpush2.xpose.msra.mxu0 %v454
        %535 = vmatprep.subr.mxu0 0.0
        %536 = vmatpush2.xpose.msra.mxu0 %v451
        %537 = vmatprep.subr.mxu0 0.0
        %538 = vmatpush2.xpose.msra.mxu0 %v448
        %539 = vmatprep.subr.mxu0 0.0
        %540 = vmatpush2.xpose.msra.mxu0 %v445
        %541 = vmatprep.subr.mxu0 0.0
        %542 = vmatpush2.xpose.msra.mxu0 %v442
        %543 = vmatprep.subr.mxu0 0.0
        %544 = vmatpush2.xpose.msra.mxu0 %v439
        %545 = vmatprep.subr.mxu0 0.0
        %546 = vmatpush2.xpose.msra.mxu0 %v436
        %547 = vmatprep.mubr.f32.mxu0 0.0
        %548 = vmatmul.mubr.f32.gmra.mxu0 %v376
        %v549 = vpop.f32.mrf.mxu0
        %v550 = vadd.f32 %v357, %v549
        %v551 = vpop.f32.mrf.mxu0
        %v552 = vadd.f32 %v357, %v551
        %553 = vmatprep.mubr.f32.mxu0 0.0
        %554 = vmatmul.mubr.f32.gmra.mxu0 %v379
        %v555 = vpop.f32.mrf.mxu0
        %v556 = vadd.f32 %v362, %v555
        %v557 = vpop.f32.mrf.mxu0
        %v558 = vadd.f32 %v362, %v557
        %559 = vmatprep.mubr.f32.mxu0 0.0
        %560 = vmatmul.mubr.f32.gmra.mxu0 %v382
        %v561 = vpop.f32.mrf.mxu0
        %v562 = vadd.f32 %v367, %v561
        %v563 = vpop.f32.mrf.mxu0
        %v564 = vadd.f32 %v367, %v563
        %565 = vmatprep.mubr.f32.mxu0 0.0
        %566 = vmatmul.mubr.f32.gmra.mxu0 %v385
        %v567 = vpop.f32.mrf.mxu0
        %v568 = vadd.f32 %v372, %v567
        %v569 = vpop.f32.mrf.mxu0
        %v570 = vadd.f32 %v372, %v569
        %571 = vdwg.mxu0
        %vm572 = vcmp.gt.f32.partialorder %v550, 0.0
        %vm573 = vcmp.gt.f32.partialorder %v552, 0.0
        %vm574 = vcmp.gt.f32.partialorder %v556, 0.0
        %vm575 = vcmp.gt.f32.partialorder %v558, 0.0
        %vm576 = vcmp.gt.f32.partialorder %v562, 0.0
        %vm577 = vcmp.gt.f32.partialorder %v564, 0.0
        %vm578 = vcmp.gt.f32.partialorder %v568, 0.0
        %vm579 = vcmp.gt.f32.partialorder %v570, 0.0
        %v580 = vmin.f32 %v550, 0.0
        %v581 = vmin.f32 %v552, 0.0
        %v582 = vmin.f32 %v556, 0.0
        %v583 = vmin.f32 %v558, 0.0
        %v584 = vmin.f32 %v562, 0.0
        %v585 = vmin.f32 %v564, 0.0
        %v586 = vmin.f32 %v568, 0.0
        %v587 = vmin.f32 %v570, 0.0
        %v588 = vmul.f32 %v580, 1.442695
        %v589 = vpow.pop %v588
        %v590 = vmul.f32 %v581, 1.442695
        %v591 = vpow.pop %v590
        %v592 = vmul.f32 %v582, 1.442695
        %v593 = vpow.pop %v592
        %v594 = vmul.f32 %v583, 1.442695
        %v595 = vpow.pop %v594
        %v596 = vmul.f32 %v584, 1.442695
        %v597 = vpow.pop %v596
        %v598 = vmul.f32 %v585, 1.442695
        %v599 = vpow.pop %v598
        %v600 = vmul.f32 %v586, 1.442695
        %v601 = vpow.pop %v600
        %v602 = vmul.f32 %v587, 1.442695
        %v603 = vpow.pop %v602
        %v604 = vsub.f32 %v589, 1.0
        %v605 = vsub.f32 %v591, 1.0
        %v606 = vsub.f32 %v593, 1.0
        %v607 = vsub.f32 %v595, 1.0
        %v608 = vsub.f32 %v597, 1.0
        %v609 = vsub.f32 %v599, 1.0
        %v610 = vsub.f32 %v601, 1.0
        %v611 = vsub.f32 %v603, 1.0
        %v612 = vsel %vm572, %v550, %v604
        %v613 = vsel %vm573, %v552, %v605
        %v614 = vsel %vm574, %v556, %v606
        %v615 = vsel %vm575, %v558, %v607
        %v616 = vsel %vm576, %v562, %v608
        %v617 = vsel %vm577, %v564, %v609
        %v618 = vsel %vm578, %v568, %v610
        %v619 = vsel %vm579, %v570, %v611
        %v620 = vld [vmem:[%s4] sm:$0xff]
        %v621 = vld [vmem:[%s4 + $0x8] sm:$0xff]
        %v622 = vld [vmem:[%s4 + $0x10] sm:$0xff]
        %v623 = vld [vmem:[%s4 + $0x18] sm:$0xff]
        %v624 = vld [vmem:[%s5] sm:$0xff]
        %v625 = vld [vmem:[%s5 + $0x8] sm:$0xff]
        %v626 = vld [vmem:[%s5 + $0x10] sm:$0xff]
        %v627 = vld [vmem:[%s5 + $0x18] sm:$0xff]
        %629 = vset.pattern.permute.xlu0 0
        %630 = vperm.xlu0 %629, %v624
        %v631 = vpop.permute.xlu0 %630
        %634 = vset.pattern.permute.xlu0 0
        %635 = vperm.xlu0 %634, %v625
        %v636 = vpop.permute.xlu0 %635
        %639 = vset.pattern.permute.xlu0 0
        %640 = vperm.xlu0 %639, %v626
        %v641 = vpop.permute.xlu0 %640
        %644 = vset.pattern.permute.xlu0 0
        %645 = vperm.xlu0 %644, %v627
        %v646 = vpop.permute.xlu0 %645
        %vm648 = vcmask 261120
        %v650 = vsel %vm648, %v620, 0
        %v653 = vsel %vm648, %v621, 0
        %v656 = vsel %vm648, %v622, 0
        %v659 = vsel %vm648, %v623, 0
        %661 = vmatprep.subr.mxu0 0.0
        %662 = vmatpush1.msra.mxu0 0.0
        %663 = vmatprep.subr.mxu0 0.0
        %664 = vmatpush1.msra.mxu0 0.0
        %665 = vmatprep.subr.mxu0 0.0
        %666 = vmatpush1.msra.mxu0 0.0
        %667 = vmatprep.subr.mxu0 0.0
        %668 = vmatpush1.msra.mxu0 0.0
        %669 = vmatprep.subr.mxu0 0.0
        %670 = vmatpush1.msra.mxu0 0.0
        %671 = vmatprep.subr.mxu0 0.0
        %672 = vmatpush1.msra.mxu0 0.0
        %673 = vmatprep.subr.mxu0 0.0
        %674 = vmatpush1.msra.mxu0 0.0
        %675 = vmatprep.subr.mxu0 0.0
        %676 = vmatpush1.msra.mxu0 0.0
        %677 = vmatprep.subr.mxu0 0.0
        %678 = vmatpush1.msra.mxu0 0.0
        %679 = vmatprep.subr.mxu0 0.0
        %680 = vmatpush1.msra.mxu0 0.0
        %681 = vmatprep.subr.mxu0 0.0
        %682 = vmatpush1.msra.mxu0 0.0
        %683 = vmatprep.subr.mxu0 0.0
        %684 = vmatpush1.msra.mxu0 0.0
        %685 = vmatprep.subr.mxu0 %v619
        %686 = vmatpush1.msra.mxu0 %v618
        %687 = vmatprep.subr.mxu0 %v617
        %688 = vmatpush1.msra.mxu0 %v616
        %689 = vmatprep.subr.mxu0 %v615
        %690 = vmatpush1.msra.mxu0 %v614
        %691 = vmatprep.subr.mxu0 %v613
        %692 = vmatpush1.msra.mxu0 %v612
        %693 = vmatprep.subr.mxu0 0.0
        %694 = vmatpush2.msra.mxu0 0.0
        %695 = vmatprep.subr.mxu0 0.0
        %696 = vmatpush2.msra.mxu0 0.0
        %697 = vmatprep.subr.mxu0 0.0
        %698 = vmatpush2.msra.mxu0 0.0
        %699 = vmatprep.subr.mxu0 0.0
        %700 = vmatpush2.msra.mxu0 0.0
        %701 = vmatprep.subr.mxu0 0.0
        %702 = vmatpush2.msra.mxu0 0.0
        %703 = vmatprep.subr.mxu0 0.0
        %704 = vmatpush2.msra.mxu0 0.0
        %705 = vmatprep.subr.mxu0 0.0
        %706 = vmatpush2.msra.mxu0 0.0
        %707 = vmatprep.subr.mxu0 0.0
        %708 = vmatpush2.msra.mxu0 0.0
        %709 = vmatprep.subr.mxu0 0.0
        %710 = vmatpush2.msra.mxu0 0.0
        %711 = vmatprep.subr.mxu0 0.0
        %712 = vmatpush2.msra.mxu0 0.0
        %713 = vmatprep.subr.mxu0 0.0
        %714 = vmatpush2.msra.mxu0 0.0
        %715 = vmatprep.subr.mxu0 0.0
        %716 = vmatpush2.msra.mxu0 0.0
        %717 = vmatprep.subr.mxu0 0.0
        %718 = vmatpush2.msra.mxu0 0.0
        %719 = vmatprep.subr.mxu0 0.0
        %720 = vmatpush2.msra.mxu0 0.0
        %721 = vmatprep.subr.mxu0 0.0
        %722 = vmatpush2.msra.mxu0 0.0
        %723 = vmatprep.subr.mxu0 0.0
        %724 = vmatpush2.msra.mxu0 0.0
        %725 = vmatprep.mubr.f32.mxu0 0.0
        %726 = vmatmul.mubr.f32.gmra.mxu0 %v650
        %v727 = vpop.f32.mrf.mxu0
        %v728 = vadd.f32 %v631, %v727
        %v729 = vpop.f32.mrf.mxu0
        %v730 = vadd.f32 %v631, %v729
        %731 = vmatprep.mubr.f32.mxu0 0.0
        %732 = vmatmul.mubr.f32.gmra.mxu0 %v653
        %v733 = vpop.f32.mrf.mxu0
        %v734 = vadd.f32 %v636, %v733
        %v735 = vpop.f32.mrf.mxu0
        %v736 = vadd.f32 %v636, %v735
        %737 = vmatprep.mubr.f32.mxu0 0.0
        %738 = vmatmul.mubr.f32.gmra.mxu0 %v656
        %v739 = vpop.f32.mrf.mxu0
        %v740 = vadd.f32 %v641, %v739
        %v741 = vpop.f32.mrf.mxu0
        %v742 = vadd.f32 %v641, %v741
        %743 = vmatprep.mubr.f32.mxu0 0.0
        %744 = vmatmul.mubr.f32.gmra.mxu0 %v659
        %v745 = vpop.f32.mrf.mxu0
        %v746 = vadd.f32 %v646, %v745
        %v747 = vpop.f32.mrf.mxu0
        %v748 = vadd.f32 %v646, %v747
        %749 = vdwg.mxu0
        %vm750 = vcmp.gt.f32.partialorder %v728, 0.0
        %vm751 = vcmp.gt.f32.partialorder %v730, 0.0
        %vm752 = vcmp.gt.f32.partialorder %v734, 0.0
        %vm753 = vcmp.gt.f32.partialorder %v736, 0.0
        %vm754 = vcmp.gt.f32.partialorder %v740, 0.0
        %vm755 = vcmp.gt.f32.partialorder %v742, 0.0
        %vm756 = vcmp.gt.f32.partialorder %v746, 0.0
        %vm757 = vcmp.gt.f32.partialorder %v748, 0.0
        %v758 = vmin.f32 %v728, 0.0
        %v759 = vmin.f32 %v730, 0.0
        %v760 = vmin.f32 %v734, 0.0
        %v761 = vmin.f32 %v736, 0.0
        %v762 = vmin.f32 %v740, 0.0
        %v763 = vmin.f32 %v742, 0.0
        %v764 = vmin.f32 %v746, 0.0
        %v765 = vmin.f32 %v748, 0.0
        %v766 = vmul.f32 %v758, 1.442695
        %v767 = vpow.pop %v766
        %v768 = vmul.f32 %v759, 1.442695
        %v769 = vpow.pop %v768
        %v770 = vmul.f32 %v760, 1.442695
        %v771 = vpow.pop %v770
        %v772 = vmul.f32 %v761, 1.442695
        %v773 = vpow.pop %v772
        %v774 = vmul.f32 %v762, 1.442695
        %v775 = vpow.pop %v774
        %v776 = vmul.f32 %v763, 1.442695
        %v777 = vpow.pop %v776
        %v778 = vmul.f32 %v764, 1.442695
        %v779 = vpow.pop %v778
        %v780 = vmul.f32 %v765, 1.442695
        %v781 = vpow.pop %v780
        %v782 = vsub.f32 %v767, 1.0
        %v783 = vsub.f32 %v769, 1.0
        %v784 = vsub.f32 %v771, 1.0
        %v785 = vsub.f32 %v773, 1.0
        %v786 = vsub.f32 %v775, 1.0
        %v787 = vsub.f32 %v777, 1.0
        %v788 = vsub.f32 %v779, 1.0
        %v789 = vsub.f32 %v781, 1.0
        %v790 = vsel %vm750, %v728, %v782
        %v791 = vsel %vm751, %v730, %v783
        %v792 = vsel %vm752, %v734, %v784
        %v793 = vsel %vm753, %v736, %v785
        %v794 = vsel %vm754, %v740, %v786
        %v795 = vsel %vm755, %v742, %v787
        %v796 = vsel %vm756, %v746, %v788
        %v797 = vsel %vm757, %v748, %v789
        %v798 = vld [vmem:[%s6] sm:$0xff]
        %v799 = vld [vmem:[#allocation4] sm:$0x1]
        %s800 = vtos %v799
        %v801 = vstv %s800
        %v803 = vsel %vm648, %v798, 0
        %805 = vmatprep.subr.mxu0 0.0
        %806 = vmatpush1.msra.mxu0 0.0
        %807 = vmatprep.subr.mxu0 0.0
        %808 = vmatpush1.msra.mxu0 0.0
        %809 = vmatprep.subr.mxu0 0.0
        %810 = vmatpush1.msra.mxu0 0.0
        %811 = vmatprep.subr.mxu0 0.0
        %812 = vmatpush1.msra.mxu0 0.0
        %813 = vmatprep.subr.mxu0 0.0
        %814 = vmatpush1.msra.mxu0 0.0
        %815 = vmatprep.subr.mxu0 0.0
        %816 = vmatpush1.msra.mxu0 0.0
        %817 = vmatprep.subr.mxu0 0.0
        %818 = vmatpush1.msra.mxu0 0.0
        %819 = vmatprep.subr.mxu0 0.0
        %820 = vmatpush1.msra.mxu0 0.0
        %821 = vmatprep.subr.mxu0 0.0
        %822 = vmatpush1.msra.mxu0 0.0
        %823 = vmatprep.subr.mxu0 0.0
        %824 = vmatpush1.msra.mxu0 0.0
        %825 = vmatprep.subr.mxu0 0.0
        %826 = vmatpush1.msra.mxu0 0.0
        %827 = vmatprep.subr.mxu0 0.0
        %828 = vmatpush1.msra.mxu0 0.0
        %829 = vmatprep.subr.mxu0 %v797
        %830 = vmatpush1.msra.mxu0 %v796
        %831 = vmatprep.subr.mxu0 %v795
        %832 = vmatpush1.msra.mxu0 %v794
        %833 = vmatprep.subr.mxu0 %v793
        %834 = vmatpush1.msra.mxu0 %v792
        %835 = vmatprep.subr.mxu0 %v791
        %836 = vmatpush1.msra.mxu0 %v790
        %837 = vmatprep.subr.mxu0 0.0
        %838 = vmatpush2.msra.mxu0 0.0
        %839 = vmatprep.subr.mxu0 0.0
        %840 = vmatpush2.msra.mxu0 0.0
        %841 = vmatprep.subr.mxu0 0.0
        %842 = vmatpush2.msra.mxu0 0.0
        %843 = vmatprep.subr.mxu0 0.0
        %844 = vmatpush2.msra.mxu0 0.0
        %845 = vmatprep.subr.mxu0 0.0
        %846 = vmatpush2.msra.mxu0 0.0
        %847 = vmatprep.subr.mxu0 0.0
        %848 = vmatpush2.msra.mxu0 0.0
        %849 = vmatprep.subr.mxu0 0.0
        %850 = vmatpush2.msra.mxu0 0.0
        %851 = vmatprep.subr.mxu0 0.0
        %852 = vmatpush2.msra.mxu0 0.0
        %853 = vmatprep.subr.mxu0 0.0
        %854 = vmatpush2.msra.mxu0 0.0
        %855 = vmatprep.subr.mxu0 0.0
        %856 = vmatpush2.msra.mxu0 0.0
        %857 = vmatprep.subr.mxu0 0.0
        %858 = vmatpush2.msra.mxu0 0.0
        %859 = vmatprep.subr.mxu0 0.0
        %860 = vmatpush2.msra.mxu0 0.0
        %861 = vmatprep.subr.mxu0 0.0
        %862 = vmatpush2.msra.mxu0 0.0
        %863 = vmatprep.subr.mxu0 0.0
        %864 = vmatpush2.msra.mxu0 0.0
        %865 = vmatprep.subr.mxu0 0.0
        %866 = vmatpush2.msra.mxu0 0.0
        %867 = vmatprep.subr.mxu0 0.0
        %868 = vmatpush2.msra.mxu0 0.0
        %869 = vmatprep.mubr.f32.mxu0 0.0
        %870 = vmatmul.mubr.f32.gmra.mxu0 %v803
        %v871 = vpop.f32.mrf.mxu0
        %v872 = vadd.f32 %v801, %v871
        %v873 = vpop.f32.mrf.mxu0
        %v874 = vadd.f32 %v801, %v873
        %875 = vdwg.mxu0
        %vm876 = vcmp.gt.f32.partialorder %v872, 20.0
        %vm877 = vcmp.gt.f32.partialorder %v874, 20.0
        %v878 = vmin.f32 %v872, 20.0
        %v879 = vmin.f32 %v874, 20.0
        %v880 = vmul.f32 %v878, 1.442695
        %v881 = vpow.pop %v880
        %v882 = vmul.f32 %v879, 1.442695
        %v883 = vpow.pop %v882
        %v884 = vadd.f32 %v881, 1.0
        %v885 = vadd.f32 %v883, 1.0
        %v886 = vlog2.pop %v884
        %v887 = vmul.f32 %v886, 0.6931472
        %v888 = vlog2.pop %v885
        %v889 = vmul.f32 %v888, 0.6931472
        %v890 = vsel %vm876, %v872, %v887
        %v891 = vsel %vm877, %v874, %v889
        %892 = vxpose.xlu0.b32.start [1/16] %v890, 128
        %893 = vxpose.xlu0.b32.cont [2/16] 0.0, 128
        %894 = vxpose.xlu0.b32.cont [3/16] 0.0, 128
        %895 = vxpose.xlu0.b32.cont [4/16] 0.0, 128
        %896 = vxpose.xlu0.b32.cont [5/16] 0.0, 128
        %897 = vxpose.xlu0.b32.cont [6/16] 0.0, 128
        %898 = vxpose.xlu0.b32.cont [7/16] 0.0, 128
        %899 = vxpose.xlu0.b32.cont [8/16] 0.0, 128
        %900 = vxpose.xlu0.b32.cont [9/16] 0.0, 128
        %901 = vxpose.xlu0.b32.cont [10/16] 0.0, 128
        %902 = vxpose.xlu0.b32.cont [11/16] 0.0, 128
        %903 = vxpose.xlu0.b32.cont [12/16] 0.0, 128
        %904 = vxpose.xlu0.b32.cont [13/16] 0.0, 128
        %905 = vxpose.xlu0.b32.cont [14/16] 0.0, 128
        %906 = vxpose.xlu0.b32.cont [15/16] 0.0, 128
        %907 = vxpose.xlu0.b32.end [16/16] 0.0, 128
        %v908 = vpop.trf.xlu0
        %v909 = vpop.trf.xlu0
        %v910 = vpop.trf.xlu0
        %v911 = vpop.trf.xlu0
        %v912 = vpop.trf.xlu0
        %v913 = vpop.trf.xlu0
        %v914 = vpop.trf.xlu0
        %v915 = vpop.trf.xlu0
        %v916 = vpop.trf.xlu0
        %v917 = vpop.trf.xlu0
        %v918 = vpop.trf.xlu0
        %v919 = vpop.trf.xlu0
        %v920 = vpop.trf.xlu0
        %v921 = vpop.trf.xlu0
        %v922 = vpop.trf.xlu0
        %v923 = vpop.trf.xlu0
        %924 = vxpose.xlu0.b32.start [1/16] %v891, 128
        %925 = vxpose.xlu0.b32.cont [2/16] 0.0, 128
        %926 = vxpose.xlu0.b32.cont [3/16] 0.0, 128
        %927 = vxpose.xlu0.b32.cont [4/16] 0.0, 128
        %928 = vxpose.xlu0.b32.cont [5/16] 0.0, 128
        %929 = vxpose.xlu0.b32.cont [6/16] 0.0, 128
        %930 = vxpose.xlu0.b32.cont [7/16] 0.0, 128
        %931 = vxpose.xlu0.b32.cont [8/16] 0.0, 128
        %932 = vxpose.xlu0.b32.cont [9/16] 0.0, 128
        %933 = vxpose.xlu0.b32.cont [10/16] 0.0, 128
        %934 = vxpose.xlu0.b32.cont [11/16] 0.0, 128
        %935 = vxpose.xlu0.b32.cont [12/16] 0.0, 128
        %936 = vxpose.xlu0.b32.cont [13/16] 0.0, 128
        %937 = vxpose.xlu0.b32.cont [14/16] 0.0, 128
        %938 = vxpose.xlu0.b32.cont [15/16] 0.0, 128
        %939 = vxpose.xlu0.b32.end [16/16] 0.0, 128
        %v940 = vpop.trf.xlu0
        %v941 = vpop.trf.xlu0
        %v942 = vpop.trf.xlu0
        %v943 = vpop.trf.xlu0
        %v944 = vpop.trf.xlu0
        %v945 = vpop.trf.xlu0
        %v946 = vpop.trf.xlu0
        %v947 = vpop.trf.xlu0
        %v948 = vpop.trf.xlu0
        %v949 = vpop.trf.xlu0
        %v950 = vpop.trf.xlu0
        %v951 = vpop.trf.xlu0
        %v952 = vpop.trf.xlu0
        %v953 = vpop.trf.xlu0
        %v954 = vpop.trf.xlu0
        %v955 = vpop.trf.xlu0
        %956 = vrot.lane.b32.xlu0 %v305, 127
        %v957 = vpop.permute.xlu0 %956
        %958 = vrot.lane.b32.xlu0 %v306, 127
        %v959 = vpop.permute.xlu0 %958
        %960 = vrot.lane.b32.xlu0 %v307, 127
        %v961 = vpop.permute.xlu0 %960
        %962 = vrot.lane.b32.xlu0 %v308, 127
        %v963 = vpop.permute.xlu0 %962
        %964 = vrot.lane.b32.xlu0 %v309, 127
        %v965 = vpop.permute.xlu0 %964
        %966 = vrot.lane.b32.xlu0 %v310, 127
        %v967 = vpop.permute.xlu0 %966
        %968 = vrot.lane.b32.xlu0 %v311, 127
        %v969 = vpop.permute.xlu0 %968
        %970 = vrot.lane.b32.xlu0 %v312, 127
        %v971 = vpop.permute.xlu0 %970
        %972 = vrot.lane.b32.xlu0 %v313, 127
        %v973 = vpop.permute.xlu0 %972
        %974 = vrot.lane.b32.xlu0 %v314, 127
        %v975 = vpop.permute.xlu0 %974
        %976 = vrot.lane.b32.xlu0 %v315, 127
        %v977 = vpop.permute.xlu0 %976
        %978 = vrot.lane.b32.xlu0 %v316, 127
        %v979 = vpop.permute.xlu0 %978
        %980 = vrot.lane.b32.xlu0 %v317, 127
        %v981 = vpop.permute.xlu0 %980
        %982 = vrot.lane.b32.xlu0 %v318, 127
        %v983 = vpop.permute.xlu0 %982
        %984 = vrot.lane.b32.xlu0 %v319, 127
        %v985 = vpop.permute.xlu0 %984
        %986 = vrot.lane.b32.xlu0 %v320, 127
        %v987 = vpop.permute.xlu0 %986
        %988 = vrot.lane.b32.xlu0 %v321, 127
        %v989 = vpop.permute.xlu0 %988
        %990 = vrot.lane.b32.xlu0 %v322, 127
        %v991 = vpop.permute.xlu0 %990
        %992 = vrot.lane.b32.xlu0 %v323, 127
        %v993 = vpop.permute.xlu0 %992
        %994 = vrot.lane.b32.xlu0 %v324, 127
        %v995 = vpop.permute.xlu0 %994
        %996 = vrot.lane.b32.xlu0 %v325, 127
        %v997 = vpop.permute.xlu0 %996
        %998 = vrot.lane.b32.xlu0 %v326, 127
        %v999 = vpop.permute.xlu0 %998
        %1000 = vrot.lane.b32.xlu0 %v327, 127
        %v1001 = vpop.permute.xlu0 %1000
        %1002 = vrot.lane.b32.xlu0 %v328, 127
        %v1003 = vpop.permute.xlu0 %1002
        %1004 = vrot.lane.b32.xlu0 %v329, 127
        %v1005 = vpop.permute.xlu0 %1004
        %1006 = vrot.lane.b32.xlu0 %v330, 127
        %v1007 = vpop.permute.xlu0 %1006
        %1008 = vrot.lane.b32.xlu0 %v331, 127
        %v1009 = vpop.permute.xlu0 %1008
        %1010 = vrot.lane.b32.xlu0 %v332, 127
        %v1011 = vpop.permute.xlu0 %1010
        %1012 = vrot.lane.b32.xlu0 %v333, 127
        %v1013 = vpop.permute.xlu0 %1012
        %1014 = vrot.lane.b32.xlu0 %v334, 127
        %v1015 = vpop.permute.xlu0 %1014
        %1016 = vrot.lane.b32.xlu0 %v335, 127
        %v1017 = vpop.permute.xlu0 %1016
        %1018 = vrot.lane.b32.xlu0 %v336, 127
        %v1019 = vpop.permute.xlu0 %1018
        %v1052 = vmul.f32 %v908, %v957
        %v1053 = vmul.f32 %v909, %v959
        %v1054 = vmul.f32 %v910, %v961
        %v1055 = vmul.f32 %v911, %v963
        %v1056 = vmul.f32 %v912, %v965
        %v1057 = vmul.f32 %v913, %v967
        %v1058 = vmul.f32 %v914, %v969
        %v1059 = vmul.f32 %v915, %v971
        %v1060 = vmul.f32 %v916, %v973
        %v1061 = vmul.f32 %v917, %v975
        %v1062 = vmul.f32 %v918, %v977
        %v1063 = vmul.f32 %v919, %v979
        %v1064 = vmul.f32 %v920, %v981
        %v1065 = vmul.f32 %v921, %v983
        %v1066 = vmul.f32 %v922, %v985
        %v1067 = vmul.f32 %v923, %v987
        %v1068 = vmul.f32 %v940, %v989
        %v1069 = vmul.f32 %v941, %v991
        %v1070 = vmul.f32 %v942, %v993
        %v1071 = vmul.f32 %v943, %v995
        %v1072 = vmul.f32 %v944, %v997
        %v1073 = vmul.f32 %v945, %v999
        %v1074 = vmul.f32 %v946, %v1001
        %v1075 = vmul.f32 %v947, %v1003
        %v1076 = vmul.f32 %v948, %v1005
        %v1077 = vmul.f32 %v949, %v1007
        %v1078 = vmul.f32 %v950, %v1009
        %v1079 = vmul.f32 %v951, %v1011
        %v1080 = vmul.f32 %v952, %v1013
        %v1081 = vmul.f32 %v953, %v1015
        %v1082 = vmul.f32 %v954, %v1017
        %v1083 = vmul.f32 %v955, %v1019
        %vm1084 = vcmp.eq.s32.totalorder %v338, 0
        %v1085 = vsel %vm1084, 1, 0
        %vm1086 = vcmp.eq.s32.totalorder %v1085, 1
        %1088 = vset.pattern.permute.xlu0 0
        %1089 = vperm.xlu0 %1088, %v1052
        %v1090 = vpop.permute.xlu0 %1089
        %1093 = vset.pattern.permute.xlu0 0
        %1094 = vperm.xlu0 %1093, %v1053
        %v1095 = vpop.permute.xlu0 %1094
        %1098 = vset.pattern.permute.xlu0 0
        %1099 = vperm.xlu0 %1098, %v1054
        %v1100 = vpop.permute.xlu0 %1099
        %1103 = vset.pattern.permute.xlu0 0
        %1104 = vperm.xlu0 %1103, %v1055
        %v1105 = vpop.permute.xlu0 %1104
        %1108 = vset.pattern.permute.xlu0 0
        %1109 = vperm.xlu0 %1108, %v1056
        %v1110 = vpop.permute.xlu0 %1109
        %1113 = vset.pattern.permute.xlu0 0
        %1114 = vperm.xlu0 %1113, %v1057
        %v1115 = vpop.permute.xlu0 %1114
        %1118 = vset.pattern.permute.xlu0 0
        %1119 = vperm.xlu0 %1118, %v1058
        %v1120 = vpop.permute.xlu0 %1119
        %1123 = vset.pattern.permute.xlu0 0
        %1124 = vperm.xlu0 %1123, %v1059
        %v1125 = vpop.permute.xlu0 %1124
        %1128 = vset.pattern.permute.xlu0 0
        %1129 = vperm.xlu0 %1128, %v1060
        %v1130 = vpop.permute.xlu0 %1129
        %1133 = vset.pattern.permute.xlu0 0
        %1134 = vperm.xlu0 %1133, %v1061
        %v1135 = vpop.permute.xlu0 %1134
        %1138 = vset.pattern.permute.xlu0 0
        %1139 = vperm.xlu0 %1138, %v1062
        %v1140 = vpop.permute.xlu0 %1139
        %1143 = vset.pattern.permute.xlu0 0
        %1144 = vperm.xlu0 %1143, %v1063
        %v1145 = vpop.permute.xlu0 %1144
        %1148 = vset.pattern.permute.xlu0 0
        %1149 = vperm.xlu0 %1148, %v1064
        %v1150 = vpop.permute.xlu0 %1149
        %1153 = vset.pattern.permute.xlu0 0
        %1154 = vperm.xlu0 %1153, %v1065
        %v1155 = vpop.permute.xlu0 %1154
        %1158 = vset.pattern.permute.xlu0 0
        %1159 = vperm.xlu0 %1158, %v1066
        %v1160 = vpop.permute.xlu0 %1159
        %1163 = vset.pattern.permute.xlu0 0
        %1164 = vperm.xlu0 %1163, %v1067
        %v1165 = vpop.permute.xlu0 %1164
        %1168 = vset.pattern.permute.xlu0 0
        %1169 = vperm.xlu0 %1168, %v1068
        %v1170 = vpop.permute.xlu0 %1169
        %1173 = vset.pattern.permute.xlu0 0
        %1174 = vperm.xlu0 %1173, %v1069
        %v1175 = vpop.permute.xlu0 %1174
        %1178 = vset.pattern.permute.xlu0 0
        %1179 = vperm.xlu0 %1178, %v1070
        %v1180 = vpop.permute.xlu0 %1179
        %1183 = vset.pattern.permute.xlu0 0
        %1184 = vperm.xlu0 %1183, %v1071
        %v1185 = vpop.permute.xlu0 %1184
        %1188 = vset.pattern.permute.xlu0 0
        %1189 = vperm.xlu0 %1188, %v1072
        %v1190 = vpop.permute.xlu0 %1189
        %1193 = vset.pattern.permute.xlu0 0
        %1194 = vperm.xlu0 %1193, %v1073
        %v1195 = vpop.permute.xlu0 %1194
        %1198 = vset.pattern.permute.xlu0 0
        %1199 = vperm.xlu0 %1198, %v1074
        %v1200 = vpop.permute.xlu0 %1199
        %1203 = vset.pattern.permute.xlu0 0
        %1204 = vperm.xlu0 %1203, %v1075
        %v1205 = vpop.permute.xlu0 %1204
        %1208 = vset.pattern.permute.xlu0 0
        %1209 = vperm.xlu0 %1208, %v1076
        %v1210 = vpop.permute.xlu0 %1209
        %1213 = vset.pattern.permute.xlu0 0
        %1214 = vperm.xlu0 %1213, %v1077
        %v1215 = vpop.permute.xlu0 %1214
        %1218 = vset.pattern.permute.xlu0 0
        %1219 = vperm.xlu0 %1218, %v1078
        %v1220 = vpop.permute.xlu0 %1219
        %1223 = vset.pattern.permute.xlu0 0
        %1224 = vperm.xlu0 %1223, %v1079
        %v1225 = vpop.permute.xlu0 %1224
        %1228 = vset.pattern.permute.xlu0 0
        %1229 = vperm.xlu0 %1228, %v1080
        %v1230 = vpop.permute.xlu0 %1229
        %1233 = vset.pattern.permute.xlu0 0
        %1234 = vperm.xlu0 %1233, %v1081
        %v1235 = vpop.permute.xlu0 %1234
        %1238 = vset.pattern.permute.xlu0 0
        %1239 = vperm.xlu0 %1238, %v1082
        %v1240 = vpop.permute.xlu0 %1239
        %1243 = vset.pattern.permute.xlu0 0
        %1244 = vperm.xlu0 %1243, %v1083
        %v1245 = vpop.permute.xlu0 %1244
        %v1247 = vsel %vm1086, %v1090, 0.0
        %v1248 = vsel %vm1086, %v1095, 0.0
        %v1249 = vsel %vm1086, %v1100, 0.0
        %v1250 = vsel %vm1086, %v1105, 0.0
        %v1251 = vsel %vm1086, %v1110, 0.0
        %v1252 = vsel %vm1086, %v1115, 0.0
        %v1253 = vsel %vm1086, %v1120, 0.0
        %v1254 = vsel %vm1086, %v1125, 0.0
        %v1255 = vsel %vm1086, %v1130, 0.0
        %v1256 = vsel %vm1086, %v1135, 0.0
        %v1257 = vsel %vm1086, %v1140, 0.0
        %v1258 = vsel %vm1086, %v1145, 0.0
        %v1259 = vsel %vm1086, %v1150, 0.0
        %v1260 = vsel %vm1086, %v1155, 0.0
        %v1261 = vsel %vm1086, %v1160, 0.0
        %v1262 = vsel %vm1086, %v1165, 0.0
        %v1263 = vsel %vm1086, %v1170, 0.0
        %v1264 = vsel %vm1086, %v1175, 0.0
        %v1265 = vsel %vm1086, %v1180, 0.0
        %v1266 = vsel %vm1086, %v1185, 0.0
        %v1267 = vsel %vm1086, %v1190, 0.0
        %v1268 = vsel %vm1086, %v1195, 0.0
        %v1269 = vsel %vm1086, %v1200, 0.0
        %v1270 = vsel %vm1086, %v1205, 0.0
        %v1271 = vsel %vm1086, %v1210, 0.0
        %v1272 = vsel %vm1086, %v1215, 0.0
        %v1273 = vsel %vm1086, %v1220, 0.0
        %v1274 = vsel %vm1086, %v1225, 0.0
        %v1275 = vsel %vm1086, %v1230, 0.0
        %v1276 = vsel %vm1086, %v1235, 0.0
        %v1277 = vsel %vm1086, %v1240, 0.0
        %v1278 = vsel %vm1086, %v1245, 0.0
        %1279 = vst.msk [vmem:[%s284] sm:$0xff] %vm374, %v1247
        %1280 = vst.msk [vmem:[%s284 + $0x8] sm:$0xff] %vm374, %v1248
        %1281 = vst.msk [vmem:[%s284 + $0x10] sm:$0xff] %vm374, %v1249
        %1282 = vst.msk [vmem:[%s284 + $0x18] sm:$0xff] %vm374, %v1250
        %1283 = vst.msk [vmem:[%s284 + $0x20] sm:$0xff] %vm374, %v1251
        %1284 = vst.msk [vmem:[%s284 + $0x28] sm:$0xff] %vm374, %v1252
        %1285 = vst.msk [vmem:[%s284 + $0x30] sm:$0xff] %vm374, %v1253
        %1286 = vst.msk [vmem:[%s284 + $0x38] sm:$0xff] %vm374, %v1254
        %1287 = vst.msk [vmem:[%s284 + $0x40] sm:$0xff] %vm374, %v1255
        %1288 = vst.msk [vmem:[%s284 + $0x48] sm:$0xff] %vm374, %v1256
        %1289 = vst.msk [vmem:[%s284 + $0x50] sm:$0xff] %vm374, %v1257
        %1290 = vst.msk [vmem:[%s284 + $0x58] sm:$0xff] %vm374, %v1258
        %1291 = vst.msk [vmem:[%s284 + $0x60] sm:$0xff] %vm374, %v1259
        %1292 = vst.msk [vmem:[%s284 + $0x68] sm:$0xff] %vm374, %v1260
        %1293 = vst.msk [vmem:[%s284 + $0x70] sm:$0xff] %vm374, %v1261
        %1294 = vst.msk [vmem:[%s284 + $0x78] sm:$0xff] %vm374, %v1262
        %1295 = vst.msk [vmem:[%s284 + $0x80] sm:$0xff] %vm374, %v1263
        %1296 = vst.msk [vmem:[%s284 + $0x88] sm:$0xff] %vm374, %v1264
        %1297 = vst.msk [vmem:[%s284 + $0x90] sm:$0xff] %vm374, %v1265
        %1298 = vst.msk [vmem:[%s284 + $0x98] sm:$0xff] %vm374, %v1266
        %1299 = vst.msk [vmem:[%s284 + $0xa0] sm:$0xff] %vm374, %v1267
        %1300 = vst.msk [vmem:[%s284 + $0xa8] sm:$0xff] %vm374, %v1268
        %1301 = vst.msk [vmem:[%s284 + $0xb0] sm:$0xff] %vm374, %v1269
        %1302 = vst.msk [vmem:[%s284 + $0xb8] sm:$0xff] %vm374, %v1270
        %1303 = vst.msk [vmem:[%s284 + $0xc0] sm:$0xff] %vm374, %v1271
        %1304 = vst.msk [vmem:[%s284 + $0xc8] sm:$0xff] %vm374, %v1272
        %1305 = vst.msk [vmem:[%s284 + $0xd0] sm:$0xff] %vm374, %v1273
        %1306 = vst.msk [vmem:[%s284 + $0xd8] sm:$0xff] %vm374, %v1274
        %1307 = vst.msk [vmem:[%s284 + $0xe0] sm:$0xff] %vm374, %v1275
        %1308 = vst.msk [vmem:[%s284 + $0xe8] sm:$0xff] %vm374, %v1276
        %1309 = vst.msk [vmem:[%s284 + $0xf0] sm:$0xff] %vm374, %v1277
        %1310 = vst.msk [vmem:[%s284 + $0xf8] sm:$0xff] %vm374, %v1278
        %s1311 = sand.u32 %s182, 1
        %s1312 = sand.u32 %s182, 1
        %s1313 = smul.addr %s1312, 256
        %s1314 = scalar_lea.vmem [#allocation5], %s1313
        // Predicated region
        $region49: #{tpu_custom_call.1} parent=47 // pred_check
          %p1315 = pneg %p192
        $region50: #{tpu_custom_call.1} parent=47 // pred_check_branch
          %1317 = sbr.rel (%p1315) target = $region52
        $region51: #{tpu_custom_call.1} parent=47 // pred_region
          %s1318 = smul.u32 32, %s22
          %s1319 = ssub.s32 38, %s1318
          %p1320 = scmp.lt.s32.totalorder %s1319, 32
          %s1321 = scalar_select %p1320, %s1319, 32
          %s1322 = smul.u32 128, %s1321
          %p1323 = scmp.ne.s32.totalorder 0, %s1322
          %s1324 = smul.addr %s1318, 8
          %s1325 = scalar_lea.vmem %s8, %s1324
          // Predicated region
          $region53: #{tpu_custom_call.1} parent=51 // pred_check
            %p1326 = pneg %p1323
          $region54: #{tpu_custom_call.1} parent=51 // pred_check_branch
            %1328 = sbr.rel (%p1326) target = $region56
          $region55: #{tpu_custom_call.1} parent=51 // pred_region
            // Predicated region
            $region57: #{tpu_custom_call.1} parent=55 // pred_check
              _
            $region58: #{tpu_custom_call.1} parent=55 // pred_check_branch
              %1330 = sbr.rel (0) target = $region60
            $region59: #{tpu_custom_call.1} parent=55 // pred_region
              // Predicated region
              $region79: #{tpu_custom_call.1} parent=59 // pred_check
                _
              $region80: #{tpu_custom_call.1} parent=59 // pred_check_branch
                %1442 = sbr.rel (0) target = $region82
              $region81: #{tpu_custom_call.1} parent=59 // pred_region
                %s1443 = sshrl.u32 %s1321, 5
                // While loop
                $region83: #{tpu_custom_call.1} parent=81 // loop_pre_header
                  _
                $region84: #{tpu_custom_call.1} parent=81 // loop_header
                  %s1445 = sphi 0, %s1447
                  %p1446 = scmp.ge.s32.totalorder %s1445, %s1443
                  %s1450 = sphi 0, %s1519
                  %s1451 = sphi %s1314, %s1522
                  %s1452 = sphi %s1325, %s1523
                $region85: #{tpu_custom_call.1} parent=81 // loop_header_branch
                  %1449 = sbr.rel (%p1446) target = $region89
                $region86: #{tpu_custom_call.1} parent=81 // loop_body
                  %v1453 = vld [vmem:[%s1451] sm:$0xff]
                  %1454 = vst [vmem:[%s1452] sm:$0xff] %v1453
                  %v1455 = vld [vmem:[%s1451 + $0x8] sm:$0xff]
                  %1456 = vst [vmem:[%s1452 + $0x8] sm:$0xff] %v1455
                  %v1457 = vld [vmem:[%s1451 + $0x10] sm:$0xff]
                  %1458 = vst [vmem:[%s1452 + $0x10] sm:$0xff] %v1457
                  %v1459 = vld [vmem:[%s1451 + $0x18] sm:$0xff]
                  %1460 = vst [vmem:[%s1452 + $0x18] sm:$0xff] %v1459
                  %v1461 = vld [vmem:[%s1451 + $0x20] sm:$0xff]
                  %1462 = vst [vmem:[%s1452 + $0x20] sm:$0xff] %v1461
                  %v1463 = vld [vmem:[%s1451 + $0x28] sm:$0xff]
                  %1464 = vst [vmem:[%s1452 + $0x28] sm:$0xff] %v1463
                  %v1465 = vld [vmem:[%s1451 + $0x30] sm:$0xff]
                  %1466 = vst [vmem:[%s1452 + $0x30] sm:$0xff] %v1465
                  %v1467 = vld [vmem:[%s1451 + $0x38] sm:$0xff]
                  %1468 = vst [vmem:[%s1452 + $0x38] sm:$0xff] %v1467
                  %v1469 = vld [vmem:[%s1451 + $0x40] sm:$0xff]
                  %1470 = vst [vmem:[%s1452 + $0x40] sm:$0xff] %v1469
                  %v1471 = vld [vmem:[%s1451 + $0x48] sm:$0xff]
                  %1472 = vst [vmem:[%s1452 + $0x48] sm:$0xff] %v1471
                  %v1473 = vld [vmem:[%s1451 + $0x50] sm:$0xff]
                  %1474 = vst [vmem:[%s1452 + $0x50] sm:$0xff] %v1473
                  %v1475 = vld [vmem:[%s1451 + $0x58] sm:$0xff]
                  %1476 = vst [vmem:[%s1452 + $0x58] sm:$0xff] %v1475
                  %v1477 = vld [vmem:[%s1451 + $0x60] sm:$0xff]
                  %1478 = vst [vmem:[%s1452 + $0x60] sm:$0xff] %v1477
                  %v1479 = vld [vmem:[%s1451 + $0x68] sm:$0xff]
                  %1480 = vst [vmem:[%s1452 + $0x68] sm:$0xff] %v1479
                  %v1481 = vld [vmem:[%s1451 + $0x70] sm:$0xff]
                  %1482 = vst [vmem:[%s1452 + $0x70] sm:$0xff] %v1481
                  %v1483 = vld [vmem:[%s1451 + $0x78] sm:$0xff]
                  %1484 = vst [vmem:[%s1452 + $0x78] sm:$0xff] %v1483
                  %v1485 = vld [vmem:[%s1451 + $0x80] sm:$0xff]
                  %1486 = vst [vmem:[%s1452 + $0x80] sm:$0xff] %v1485
                  %v1487 = vld [vmem:[%s1451 + $0x88] sm:$0xff]
                  %1488 = vst [vmem:[%s1452 + $0x88] sm:$0xff] %v1487
                  %v1489 = vld [vmem:[%s1451 + $0x90] sm:$0xff]
                  %1490 = vst [vmem:[%s1452 + $0x90] sm:$0xff] %v1489
                  %v1491 = vld [vmem:[%s1451 + $0x98] sm:$0xff]
                  %1492 = vst [vmem:[%s1452 + $0x98] sm:$0xff] %v1491
                  %v1493 = vld [vmem:[%s1451 + $0xa0] sm:$0xff]
                  %1494 = vst [vmem:[%s1452 + $0xa0] sm:$0xff] %v1493
                  %v1495 = vld [vmem:[%s1451 + $0xa8] sm:$0xff]
                  %1496 = vst [vmem:[%s1452 + $0xa8] sm:$0xff] %v1495
                  %v1497 = vld [vmem:[%s1451 + $0xb0] sm:$0xff]
                  %1498 = vst [vmem:[%s1452 + $0xb0] sm:$0xff] %v1497
                  %v1499 = vld [vmem:[%s1451 + $0xb8] sm:$0xff]
                  %1500 = vst [vmem:[%s1452 + $0xb8] sm:$0xff] %v1499
                  %v1501 = vld [vmem:[%s1451 + $0xc0] sm:$0xff]
                  %1502 = vst [vmem:[%s1452 + $0xc0] sm:$0xff] %v1501
                  %v1503 = vld [vmem:[%s1451 + $0xc8] sm:$0xff]
                  %1504 = vst [vmem:[%s1452 + $0xc8] sm:$0xff] %v1503
                  %v1505 = vld [vmem:[%s1451 + $0xd0] sm:$0xff]
                  %1506 = vst [vmem:[%s1452 + $0xd0] sm:$0xff] %v1505
                  %v1507 = vld [vmem:[%s1451 + $0xd8] sm:$0xff]
                  %1508 = vst [vmem:[%s1452 + $0xd8] sm:$0xff] %v1507
                  %v1509 = vld [vmem:[%s1451 + $0xe0] sm:$0xff]
                  %1510 = vst [vmem:[%s1452 + $0xe0] sm:$0xff] %v1509
                  %v1511 = vld [vmem:[%s1451 + $0xe8] sm:$0xff]
                  %1512 = vst [vmem:[%s1452 + $0xe8] sm:$0xff] %v1511
                  %v1513 = vld [vmem:[%s1451 + $0xf0] sm:$0xff]
                  %1514 = vst [vmem:[%s1452 + $0xf0] sm:$0xff] %v1513
                  %v1515 = vld [vmem:[%s1451 + $0xf8] sm:$0xff]
                  %1516 = vst [vmem:[%s1452 + $0xf8] sm:$0xff] %v1515
                  %s1517 = sadd.s32 1, %s1450
                  %p1518 = scmp.ge.s32.totalorder %s1517, %s1443
                  %s1519 = scalar_select %p1518, 0, %s1517
                  %s1520 = smul.u32 %s1519, 256
                  %s1521 = smul.u32 %s1519, 256
                  %s1522 = scalar_lea.vmem %s1314, %s1520 [#allocation5]
                  %s1523 = scalar_lea.vmem %s1325, %s1521
                $region87: #{tpu_custom_call.1} parent=81 // loop_footer
                  %s1447 = sadd.s32 %s1445, 1
                $region88: #{tpu_custom_call.1} parent=81 // loop_footer_branch
                  %1444 = sbr.rel target = $region84
                $region89: #{tpu_custom_call.1} parent=81 // loop_exit
                  _
                %s1524 = sshrl.u32 %s1321, 5
                %s1525 = sand.u32 %s1321, 31
                %s1526 = smul.u32 %s1524, 32
                %s1527 = smul.u32 8, %s1526
                %s1528 = scalar_lea.vmem %s1314, %s1527 [#allocation5]
                %s1529 = smul.u32 8, %s1526
                %s1530 = scalar_lea.vmem %s1325, %s1529
                // While loop
                $region90: #{tpu_custom_call.1} parent=81 // loop_pre_header
                  _
                $region91: #{tpu_custom_call.1} parent=81 // loop_header
                  %s1532 = sphi 0, %s1534
                  %p1533 = scmp.ge.s32.totalorder %s1532, %s1525
                  %s1537 = sphi 0, %s1544
                  %s1538 = sphi %s1528, %s1547
                  %s1539 = sphi %s1530, %s1548
                $region92: #{tpu_custom_call.1} parent=81 // loop_header_branch
                  %1536 = sbr.rel (%p1533) target = $region96
                $region93: #{tpu_custom_call.1} parent=81 // loop_body
                  %v1540 = vld [vmem:[%s1538] sm:$0xff]
                  %1541 = vst [vmem:[%s1539] sm:$0xff] %v1540
                  %s1542 = sadd.s32 1, %s1537
                  %p1543 = scmp.ge.s32.totalorder %s1542, %s1525
                  %s1544 = scalar_select %p1543, 0, %s1542
                  %s1545 = smul.u32 %s1544, 8
                  %s1546 = smul.u32 %s1544, 8
                  %s1547 = scalar_lea.vmem %s1528, %s1545 [#allocation5]
                  %s1548 = scalar_lea.vmem %s1530, %s1546
                $region94: #{tpu_custom_call.1} parent=81 // loop_footer
                  %s1534 = sadd.s32 %s1532, 1
                $region95: #{tpu_custom_call.1} parent=81 // loop_footer_branch
                  %1531 = sbr.rel target = $region91
                $region96: #{tpu_custom_call.1} parent=81 // loop_exit
                  _
              $region82: #{tpu_custom_call.1} parent=59 // pred_fallthru
                _
              // Predicated region
              $region97: #{tpu_custom_call.1} parent=59 // pred_check
                _
              $region98: #{tpu_custom_call.1} parent=59 // pred_check_branch
                %1550 = sbr.rel target = $region100
              $region99: #{tpu_custom_call.1} parent=59 // pred_region
                _
              $region100: #{tpu_custom_call.1} parent=59 // pred_fallthru
                _
            $region60: #{tpu_custom_call.1} parent=55 // pred_fallthru
              _
            // Predicated region
            $region61: #{tpu_custom_call.1} parent=55 // pred_check
              _
            $region62: #{tpu_custom_call.1} parent=55 // pred_check_branch
              %1332 = sbr.rel target = $region64
            $region63: #{tpu_custom_call.1} parent=55 // pred_region
              %s1334 = ssub.s32 256, 1
              %s1335 = sshrl.u32 %s1321, 5
              // While loop
              $region65: #{tpu_custom_call.1} parent=63 // loop_pre_header
                _
              $region66: #{tpu_custom_call.1} parent=63 // loop_header
                %s1337 = sphi 0, %s1339
                %p1338 = scmp.ge.s32.totalorder %s1337, %s1335
                %s1342 = sphi 0, %s1411
                %s1343 = sphi %s1314, %s1414
                %s1344 = sphi %s1325, %s1415
              $region67: #{tpu_custom_call.1} parent=63 // loop_header_branch
                %1341 = sbr.rel (%p1338) target = $region71
              $region68: #{tpu_custom_call.1} parent=63 // loop_body
                %v1345 = vld [vmem:[%s1343] sm:%s1334]
                %1346 = vst [vmem:[%s1344] sm:%s1334] %v1345
                %v1347 = vld [vmem:[%s1343 + $0x8] sm:%s1334]
                %1348 = vst [vmem:[%s1344 + $0x8] sm:%s1334] %v1347
                %v1349 = vld [vmem:[%s1343 + $0x10] sm:%s1334]
                %1350 = vst [vmem:[%s1344 + $0x10] sm:%s1334] %v1349
                %v1351 = vld [vmem:[%s1343 + $0x18] sm:%s1334]
                %1352 = vst [vmem:[%s1344 + $0x18] sm:%s1334] %v1351
                %v1353 = vld [vmem:[%s1343 + $0x20] sm:%s1334]
                %1354 = vst [vmem:[%s1344 + $0x20] sm:%s1334] %v1353
                %v1355 = vld [vmem:[%s1343 + $0x28] sm:%s1334]
                %1356 = vst [vmem:[%s1344 + $0x28] sm:%s1334] %v1355
                %v1357 = vld [vmem:[%s1343 + $0x30] sm:%s1334]
                %1358 = vst [vmem:[%s1344 + $0x30] sm:%s1334] %v1357
                %v1359 = vld [vmem:[%s1343 + $0x38] sm:%s1334]
                %1360 = vst [vmem:[%s1344 + $0x38] sm:%s1334] %v1359
                %v1361 = vld [vmem:[%s1343 + $0x40] sm:%s1334]
                %1362 = vst [vmem:[%s1344 + $0x40] sm:%s1334] %v1361
                %v1363 = vld [vmem:[%s1343 + $0x48] sm:%s1334]
                %1364 = vst [vmem:[%s1344 + $0x48] sm:%s1334] %v1363
                %v1365 = vld [vmem:[%s1343 + $0x50] sm:%s1334]
                %1366 = vst [vmem:[%s1344 + $0x50] sm:%s1334] %v1365
                %v1367 = vld [vmem:[%s1343 + $0x58] sm:%s1334]
                %1368 = vst [vmem:[%s1344 + $0x58] sm:%s1334] %v1367
                %v1369 = vld [vmem:[%s1343 + $0x60] sm:%s1334]
                %1370 = vst [vmem:[%s1344 + $0x60] sm:%s1334] %v1369
                %v1371 = vld [vmem:[%s1343 + $0x68] sm:%s1334]
                %1372 = vst [vmem:[%s1344 + $0x68] sm:%s1334] %v1371
                %v1373 = vld [vmem:[%s1343 + $0x70] sm:%s1334]
                %1374 = vst [vmem:[%s1344 + $0x70] sm:%s1334] %v1373
                %v1375 = vld [vmem:[%s1343 + $0x78] sm:%s1334]
                %1376 = vst [vmem:[%s1344 + $0x78] sm:%s1334] %v1375
                %v1377 = vld [vmem:[%s1343 + $0x80] sm:%s1334]
                %1378 = vst [vmem:[%s1344 + $0x80] sm:%s1334] %v1377
                %v1379 = vld [vmem:[%s1343 + $0x88] sm:%s1334]
                %1380 = vst [vmem:[%s1344 + $0x88] sm:%s1334] %v1379
                %v1381 = vld [vmem:[%s1343 + $0x90] sm:%s1334]
                %1382 = vst [vmem:[%s1344 + $0x90] sm:%s1334] %v1381
                %v1383 = vld [vmem:[%s1343 + $0x98] sm:%s1334]
                %1384 = vst [vmem:[%s1344 + $0x98] sm:%s1334] %v1383
                %v1385 = vld [vmem:[%s1343 + $0xa0] sm:%s1334]
                %1386 = vst [vmem:[%s1344 + $0xa0] sm:%s1334] %v1385
                %v1387 = vld [vmem:[%s1343 + $0xa8] sm:%s1334]
                %1388 = vst [vmem:[%s1344 + $0xa8] sm:%s1334] %v1387
                %v1389 = vld [vmem:[%s1343 + $0xb0] sm:%s1334]
                %1390 = vst [vmem:[%s1344 + $0xb0] sm:%s1334] %v1389
                %v1391 = vld [vmem:[%s1343 + $0xb8] sm:%s1334]
                %1392 = vst [vmem:[%s1344 + $0xb8] sm:%s1334] %v1391
                %v1393 = vld [vmem:[%s1343 + $0xc0] sm:%s1334]
                %1394 = vst [vmem:[%s1344 + $0xc0] sm:%s1334] %v1393
                %v1395 = vld [vmem:[%s1343 + $0xc8] sm:%s1334]
                %1396 = vst [vmem:[%s1344 + $0xc8] sm:%s1334] %v1395
                %v1397 = vld [vmem:[%s1343 + $0xd0] sm:%s1334]
                %1398 = vst [vmem:[%s1344 + $0xd0] sm:%s1334] %v1397
                %v1399 = vld [vmem:[%s1343 + $0xd8] sm:%s1334]
                %1400 = vst [vmem:[%s1344 + $0xd8] sm:%s1334] %v1399
                %v1401 = vld [vmem:[%s1343 + $0xe0] sm:%s1334]
                %1402 = vst [vmem:[%s1344 + $0xe0] sm:%s1334] %v1401
                %v1403 = vld [vmem:[%s1343 + $0xe8] sm:%s1334]
                %1404 = vst [vmem:[%s1344 + $0xe8] sm:%s1334] %v1403
                %v1405 = vld [vmem:[%s1343 + $0xf0] sm:%s1334]
                %1406 = vst [vmem:[%s1344 + $0xf0] sm:%s1334] %v1405
                %v1407 = vld [vmem:[%s1343 + $0xf8] sm:%s1334]
                %1408 = vst [vmem:[%s1344 + $0xf8] sm:%s1334] %v1407
                %s1409 = sadd.s32 1, %s1342
                %p1410 = scmp.ge.s32.totalorder %s1409, %s1335
                %s1411 = scalar_select %p1410, 0, %s1409
                %s1412 = smul.u32 %s1411, 256
                %s1413 = smul.u32 %s1411, 256
                %s1414 = scalar_lea.vmem %s1314, %s1412 [#allocation5]
                %s1415 = scalar_lea.vmem %s1325, %s1413
              $region69: #{tpu_custom_call.1} parent=63 // loop_footer
                %s1339 = sadd.s32 %s1337, 1
              $region70: #{tpu_custom_call.1} parent=63 // loop_footer_branch
                %1336 = sbr.rel target = $region66
              $region71: #{tpu_custom_call.1} parent=63 // loop_exit
                _
              %s1416 = sshrl.u32 %s1321, 5
              %s1417 = sand.u32 %s1321, 31
              %s1418 = smul.u32 %s1416, 32
              %s1419 = smul.u32 8, %s1418
              %s1420 = scalar_lea.vmem %s1314, %s1419 [#allocation5]
              %s1421 = smul.u32 8, %s1418
              %s1422 = scalar_lea.vmem %s1325, %s1421
              // While loop
              $region72: #{tpu_custom_call.1} parent=63 // loop_pre_header
                _
              $region73: #{tpu_custom_call.1} parent=63 // loop_header
                %s1424 = sphi 0, %s1426
                %p1425 = scmp.ge.s32.totalorder %s1424, %s1417
                %s1429 = sphi 0, %s1436
                %s1430 = sphi %s1420, %s1439
                %s1431 = sphi %s1422, %s1440
              $region74: #{tpu_custom_call.1} parent=63 // loop_header_branch
                %1428 = sbr.rel (%p1425) target = $region78
              $region75: #{tpu_custom_call.1} parent=63 // loop_body
                %v1432 = vld [vmem:[%s1430] sm:%s1334]
                %1433 = vst [vmem:[%s1431] sm:%s1334] %v1432
                %s1434 = sadd.s32 1, %s1429
                %p1435 = scmp.ge.s32.totalorder %s1434, %s1417
                %s1436 = scalar_select %p1435, 0, %s1434
                %s1437 = smul.u32 %s1436, 8
                %s1438 = smul.u32 %s1436, 8
                %s1439 = scalar_lea.vmem %s1420, %s1437 [#allocation5]
                %s1440 = scalar_lea.vmem %s1422, %s1438
              $region76: #{tpu_custom_call.1} parent=63 // loop_footer
                %s1426 = sadd.s32 %s1424, 1
              $region77: #{tpu_custom_call.1} parent=63 // loop_footer_branch
                %1423 = sbr.rel target = $region73
              $region78: #{tpu_custom_call.1} parent=63 // loop_exit
                _
            $region64: #{tpu_custom_call.1} parent=55 // pred_fallthru
              _
          $region56: #{tpu_custom_call.1} parent=51 // pred_fallthru
            _
          %1551 = vnop
        $region52: #{tpu_custom_call.1} parent=47 // pred_fallthru
          _
      $region48: #{tpu_custom_call.1} parent=5 // pred_fallthru
        _
      %p1552 = scmp.le.s32.totalorder 2, %s17
      // Predicated region
      $region101: #{tpu_custom_call.1} parent=5 // pred_check
        %p1553 = pneg %p1552
      $region102: #{tpu_custom_call.1} parent=5 // pred_check_branch
        %1555 = sbr.rel (%p1553) target = $region104
      $region103: #{tpu_custom_call.1} parent=5 // pred_region
        %s1556 = ssub.s32 %s17, 2
        // Predicated region
        $region105: #{tpu_custom_call.1} parent=103 // pred_check
          %p1557 = pneg %p198
        $region106: #{tpu_custom_call.1} parent=103 // pred_check_branch
          %1559 = sbr.rel (%p1557) target = $region108
        $region107: #{tpu_custom_call.1} parent=103 // pred_region
          %s1560 = sand.u32 %s183, 1
          %s1561 = sand.u32 %s183, 1
          %s1562 = smul.addr %s1561, 256
          %s1563 = scalar_lea.vmem [#allocation5], %s1562
        $region108: #{tpu_custom_call.1} parent=103 // pred_fallthru
          _
      $region104: #{tpu_custom_call.1} parent=5 // pred_fallthru
        _
    $region6: #{tpu_custom_call.1} parent=1 // loop_footer
      %s21 = sadd.s32 1, %s17
    $region7: #{tpu_custom_call.1} parent=1 // loop_footer_branch
      %16 = sbr.rel target = $region3
    $region8: #{tpu_custom_call.1} parent=1 // loop_exit
      _

</llo_original>
